<compile_context>
chip_gen: v6e
topology: v6e:2x2x1
jax: 0.10.0
libtpu: 0.0.40
codegen_flags: <defaults>
</compile_context>

<pallas_src>
import functools

import jax
import jax.numpy as jnp
from jax.experimental import pallas as pl
from jax.experimental.pallas import tpu as pltpu


def _lstm_kernel(x_ref, wih_ref, whh_ref, b_ref, w1_ref, b1_ref, w2_ref, b2_ref,
                 out_ref, gx_ref, *, n_steps, batch, gate):
    Bp, G, T = batch, gate, n_steps

    # ---- Phase 1 (off the serial path): input projection for every timestep at once.
    #      gx[t*Bp:(t+1)*Bp, :] = x_t @ W_ih^T + (b_ih + b_hh)   (gate cols already
    #      reordered to [i,f,o,g] and sigmoid cols pre-scaled by 0.5 at pack time).
    gx_ref[...] = (
        jnp.dot(x_ref[...], wih_ref[...], preferred_element_type=jnp.float32)
        + b_ref[...])

    # Hoist the recurrent weight load out of the serial loop: one VMEM read instead of
    # one per unrolled step (~32 bf16 vregs at G=128; fits alongside the live gate vregs).
    whh = whh_ref[...]                                          # (G, 4G) bf16

    # ---- Phase 2: sequential recurrence; h/c live as f32 values.
    def step(t, carry):
        h, c = carry                                            # (Bp, G) f32 each
        off = pl.multiple_of(t * Bp, Bp)                        # sublane-tile aligned
        z = gx_ref[pl.ds(off, Bp), :] + jnp.dot(
            h.astype(jnp.bfloat16), whh, preferred_element_type=jnp.float32)
        # Single EUP stream over all 4 gate blocks; sigmoid gates were pre-scaled by 0.5
        # so sigmoid(orig) = 0.5 * tanh(z) + 0.5 for the [i|f|o] block.
        t_all = jnp.tanh(z)                                     # (Bp, 4G)
        sig = 0.5 * t_all[:, 0:3 * G] + 0.5                     # [i | f | o]
        i_g = sig[:, 0 * G:1 * G]
        f_g = sig[:, 1 * G:2 * G]
        o_g = sig[:, 2 * G:3 * G]
        g_g = t_all[:, 3 * G:4 * G]                             # cell gate (true tanh)
        c_new = f_g * c + i_g * g_g
        h_new = o_g * jnp.tanh(c_new)
        return h_new, c_new

    init = (jnp.zeros((Bp, G), jnp.float32), jnp.zeros((Bp, G), jnp.float32))
    h_fin, _ = jax.lax.fori_loop(0, T, step, init, unroll=min(T, 8))

    # ---- Phase 3: FC head epilogue (dropout layers are identity in eval mode).
    fc1 = (jnp.dot(h_fin.astype(jnp.bfloat16), w1_ref[...],
                   preferred_element_type=jnp.float32) + b1_ref[...])
    fc1 = jnp.maximum(fc1, 0.0)                                 # ReLU
    out = (jnp.dot(fc1.astype(jnp.bfloat16), w2_ref[...],
                   preferred_element_type=jnp.float32) + b2_ref[...])
    out_ref[...] = out.astype(out_ref.dtype)


@jax.jit
def lstm_forward(x, w_ih, w_hh, b, w1, b1, w2, b2):
    """x: (B, T, F) batch_first f32; packed params from pack_params(). Returns (B, OUT)."""
    B, T, F = x.shape
    G = w_hh.shape[0]                     # padded per-gate width (== h/c lane width)
    OUT = w2.shape[1]
    Bp = max(8, -(-B // 8) * 8)           # pad batch to a full f32 sublane tile

    # Time-major, batch-padded, flattened to 2D so the hoisted projection writes each
    # step's slab at a sublane-tile-aligned offset t*Bp.  Tiny one-time copy; at large T
    # one would switch to time-chunked gx interleaved with the recurrence instead.
    x_tm = jnp.transpose(x, (1, 0, 2))                          # (T, B, F)
    x_tm = jnp.pad(x_tm, ((0, 0), (0, Bp - B), (0, 0)))         # (T, Bp, F)
    x2d = x_tm.reshape(T * Bp, F).astype(jnp.bfloat16)          # (T*Bp, F)

    # Static VMEM footprint (gridless call -> no double-buffering factor).  Only set an
    # explicit limit when it would exceed the smallest scoped default (v5e: 16 MiB); cap
    # under v7x's 64 MiB physical budget.
    vmem_bytes = (x2d.size * 2 + w_ih.size * 2 + w_hh.size * 2 + b.size * 4 +
                  w1.size * 2 + b1.size * 4 + w2.size * 2 + b2.size * 4 +
                  Bp * OUT * 4 + T * Bp * 4 * G * 4)
    compiler_params = None
    if vmem_bytes > 12 * 1024 * 1024:
        compiler_params = pltpu.CompilerParams(
            vmem_limit_bytes=min(int(vmem_bytes * 1.5) + (1 << 20), 60 * 1024 * 1024))

    kernel = functools.partial(_lstm_kernel, n_steps=T, batch=Bp, gate=G)
    out = pl.pallas_call(
        kernel,
        out_shape=jax.ShapeDtypeStruct((Bp, OUT), jnp.float32),
        in_specs=[pl.BlockSpec(memory_space=pltpu.MemorySpace.VMEM)] * 8,
        out_specs=pl.BlockSpec(memory_space=pltpu.MemorySpace.VMEM),
        scratch_shapes=[pltpu.VMEM((T * Bp, 4 * G), jnp.float32)],   # hoisted x@W_ih + b
        compiler_params=compiler_params,
    )(x2d, w_ih, w_hh, b, w1, b1, w2, b2)
    return out[:B]


def init_params(key, n_features=4, hidden_dim=64, fc_dim=32, output_dim=4):
    """PyTorch-layout params, default init U(-k, k) with k = 1/sqrt(fan_in)."""
    ks = jax.random.split(key, 8)
    k_l = 1.0 / jnp.sqrt(hidden_dim)
    w_ih = jax.random.uniform(ks[0], (4 * hidden_dim, n_features), jnp.float32, -k_l, k_l)
    w_hh = jax.random.uniform(ks[1], (4 * hidden_dim, hidden_dim), jnp.float32, -k_l, k_l)
    b_ih = jax.random.uniform(ks[2], (4 * hidden_dim,), jnp.float32, -k_l, k_l)
    b_hh = jax.random.uniform(ks[3], (4 * hidden_dim,), jnp.float32, -k_l, k_l)
    k1 = 1.0 / jnp.sqrt(hidden_dim)
    w1 = jax.random.uniform(ks[4], (fc_dim, hidden_dim), jnp.float32, -k1, k1)
    b1 = jax.random.uniform(ks[5], (fc_dim,), jnp.float32, -k1, k1)
    k2 = 1.0 / jnp.sqrt(fc_dim)
    w2 = jax.random.uniform(ks[6], (output_dim, fc_dim), jnp.float32, -k2, k2)
    b2 = jax.random.uniform(ks[7], (output_dim,), jnp.float32, -k2, k2)
    return dict(w_ih=w_ih, w_hh=w_hh, b_ih=b_ih, b_hh=b_hh, w1=w1, b1=b1, w2=w2, b2=b2)


def pack_params(p, *, lane=128):
    """Repack PyTorch-layout params into the kernel layout (one-time, off the hot path):
       - transpose weights so in-kernel matmuls are row-major x @ W,
       - reorder LSTM gate blocks from PyTorch [i,f,g,o] to kernel [i,f,o,g]
         (sigmoid gates contiguous),
       - pre-scale the sigmoid gates' (i,f,o) weight/bias columns by 0.5 so the kernel can
         evaluate them as 0.5*tanh(.)+0.5 with no extra per-step multiply,
       - pad each gate block from H to G = roundup(H, 128) lanes (vreg-aligned slices),
       - pad W_hh's h-input rows and fc1's input rows to G (padded h lanes stay zero),
       - pre-sum b_ih + b_hh,
       - cast MXU operands (weights) to bf16; biases stay f32."""
    H = p["w_hh"].shape[1]
    G = -(-H // lane) * lane
    order = (0, 1, 3, 2)          # source block (PyTorch [i,f,g,o]) for kernel [i,f,o,g]
    scale = (0.5, 0.5, 0.5, 1.0)  # 0.5 on sigmoid gates (exact in bf16), 1.0 on cell gate

    def repack_cols(w_t):                         # (in, 4H) -> (in, 4G)
        blocks = []
        for src, s in zip(order, scale):
            blk = w_t[:, src * H:(src + 1) * H] * s
            blocks.append(jnp.pad(blk, ((0, 0), (0, G - H))))
        return jnp.concatenate(blocks, axis=1)

    w_ih_p = repack_cols(p["w_ih"].T)                                    # (F, 4G)
    w_hh_p = jnp.pad(repack_cols(p["w_hh"].T), ((0, G - H), (0, 0)))     # (G, 4G)
    b_p = repack_cols((p["b_ih"] + p["b_hh"]).reshape(1, -1))            # (1, 4G)
    w1_p = jnp.pad(p["w1"].T, ((0, G - H), (0, 0)))                      # (G, FC)

    return dict(
        w_ih=w_ih_p.astype(jnp.bfloat16),
        w_hh=w_hh_p.astype(jnp.bfloat16),
        b=b_p.astype(jnp.float32),
        w1=w1_p.astype(jnp.bfloat16),
        b1=p["b1"].reshape(1, -1).astype(jnp.float32),
        w2=p["w2"].T.astype(jnp.bfloat16),
        b2=p["b2"].reshape(1, -1).astype(jnp.float32),
    )


def reference_forward(x, p):
    """Pure-JAX f32 reference of the PyTorch module's forward pass (eval mode)."""
    B, T, F = x.shape
    H = p["w_hh"].shape[1]
    w_ih_t, w_hh_t = p["w_ih"].T, p["w_hh"].T
    b = (p["b_ih"] + p["b_hh"]).reshape(1, -1)
    h = jnp.zeros((B, H), jnp.float32)
    c = jnp.zeros((B, H), jnp.float32)
    for t in range(T):
        gates = x[:, t, :] @ w_ih_t + h @ w_hh_t + b
        i_g = jax.nn.sigmoid(gates[:, 0 * H:1 * H])
        f_g = jax.nn.sigmoid(gates[:, 1 * H:2 * H])
        g_g = jnp.tanh(gates[:, 2 * H:3 * H])
        o_g = jax.nn.sigmoid(gates[:, 3 * H:4 * H])
        c = f_g * c + i_g * g_g
        h = o_g * jnp.tanh(c)
    fc1 = jnp.maximum(h @ p["w1"].T + p["b1"].reshape(1, -1), 0.0)
    return fc1 @ p["w2"].T + p["b2"].reshape(1, -1)


if __name__ == "__main__":
    B, T, F = 2, 8, 4
    H, FC, OUT = 64, 32, 4

    key = jax.random.PRNGKey(0)
    k_x, k_p = jax.random.split(key)
    x = jax.random.normal(k_x, (B, T, F), jnp.float32)

    raw = init_params(k_p, n_features=F, hidden_dim=H, fc_dim=FC, output_dim=OUT)
    packed = pack_params(raw)

    y = lstm_forward(x, packed["w_ih"], packed["w_hh"], packed["b"],
                     packed["w1"], packed["b1"], packed["w2"], packed["b2"])
    y = jax.block_until_ready(y)

    y_ref = reference_forward(x, raw)
    assert y.shape == (B, OUT)
    # bf16 MXU operands (f32 accumulation/state) -> loose-but-meaningful tolerance.
    assert jnp.allclose(y, y_ref, atol=2e-2, rtol=2e-2), (y, y_ref)

    print("KERNEL_OK")
</pallas_src>

<mosaic_0001>
module attributes {stable_mosaic.version = 11 : i64} {
  func.func @_lstm_kernel(%arg0: memref<64x4xbf16, #tpu.memory_space<vmem>>, %arg1: memref<4x512xbf16, #tpu.memory_space<vmem>>, %arg2: memref<128x512xbf16, #tpu.memory_space<vmem>>, %arg3: memref<1x512xf32, #tpu.memory_space<vmem>>, %arg4: memref<128x32xbf16, #tpu.memory_space<vmem>>, %arg5: memref<1x32xf32, #tpu.memory_space<vmem>>, %arg6: memref<32x4xbf16, #tpu.memory_space<vmem>>, %arg7: memref<1x4xf32, #tpu.memory_space<vmem>>, %arg8: memref<8x4xf32, #tpu.memory_space<vmem>>, %arg9: memref<64x512xf32, #tpu.memory_space<vmem>>) attributes {dimension_semantics = [], scalar_prefetch = 0 : i64, scratch_operands = 1 : i64, tpu.core_type = #tpu.core_type<tc>} {
    %c0 = arith.constant 0 : index
    %c0_0 = arith.constant 0 : index
    %0 = vector.load %arg0[%c0, %c0_0] : memref<64x4xbf16, #tpu.memory_space<vmem>>, vector<64x4xbf16>
    %c0_1 = arith.constant 0 : index
    %c0_2 = arith.constant 0 : index
    %1 = vector.load %arg1[%c0_1, %c0_2] : memref<4x512xbf16, #tpu.memory_space<vmem>>, vector<4x512xbf16>
    %cst = arith.constant dense<0.000000e+00> : vector<64x512xf32>
    %2 = tpu.matmul %0, %1, %cst {dimension_numbers = #tpu.dot_dimension_numbers<[1], [0], [0], [1], [0, 0, 1, 1], [], []>} : vector<64x4xbf16>, vector<4x512xbf16>, vector<64x512xf32> -> vector<64x512xf32>
    %c0_3 = arith.constant 0 : index
    %c0_4 = arith.constant 0 : index
    %3 = vector.load %arg3[%c0_3, %c0_4] : memref<1x512xf32, #tpu.memory_space<vmem>>, vector<1x512xf32>
    %4 = vector.broadcast %3 : vector<1x512xf32> to vector<64x512xf32>
    %5 = arith.addf %2, %4 : vector<64x512xf32>
    %c0_5 = arith.constant 0 : index
    %c0_6 = arith.constant 0 : index
    %6 = vector.load %arg9[%c0_5, %c0_6] : memref<64x512xf32, #tpu.memory_space<vmem>>, vector<64x512xf32>
    tpu.vector_store %arg9[%c0_5, %c0_6], %5 {strides = array<i32>} : memref<64x512xf32, #tpu.memory_space<vmem>>, vector<64x512xf32>,
    %c0_7 = arith.constant 0 : index
    %c0_8 = arith.constant 0 : index
    %7 = vector.load %arg2[%c0_7, %c0_8] : memref<128x512xbf16, #tpu.memory_space<vmem>>, vector<128x512xbf16>
    %cst_9 = arith.constant 0.000000e+00 : f32
    %8 = vector.broadcast %cst_9 : f32 to vector<8x128xf32>
    %cst_10 = arith.constant 0.000000e+00 : f32
    %9 = vector.broadcast %cst_10 : f32 to vector<8x128xf32>
    %c0_i32 = arith.constant 0 : i32
    %c8_i32 = arith.constant 8 : i32
    %10 = arith.muli %c0_i32, %c8_i32 : i32
    %11 = tpu.assume_multiple %10, 8 : i32
    %12 = arith.index_cast %11 : i32 to index
    %c0_11 = arith.constant 0 : index
    %13 = vector.load %arg9[%12, %c0_11] : memref<64x512xf32, #tpu.memory_space<vmem>>, vector<8x512xf32>
    %14 = arith.truncf %8 : vector<8x128xf32> to vector<8x128xbf16>
    %cst_12 = arith.constant dense<0.000000e+00> : vector<8x512xf32>
    %15 = tpu.matmul %14, %7, %cst_12 {dimension_numbers = #tpu.dot_dimension_numbers<[1], [0], [0], [1], [0, 0, 1, 1], [], []>} : vector<8x128xbf16>, vector<128x512xbf16>, vector<8x512xf32> -> vector<8x512xf32>
    %16 = arith.addf %13, %15 : vector<8x512xf32>
    %17 = math.tanh %16 : vector<8x512xf32>
    %18 = vector.extract_strided_slice %17 {offsets = [0, 0], sizes = [8, 384], strides = [1, 1]} : vector<8x512xf32> to vector<8x384xf32>
    %cst_13 = arith.constant 5.000000e-01 : f32
    %19 = vector.broadcast %cst_13 : f32 to vector<8x384xf32>
    %20 = arith.mulf %19, %18 : vector<8x384xf32>
    %cst_14 = arith.constant 5.000000e-01 : f32
    %21 = vector.broadcast %cst_14 : f32 to vector<8x384xf32>
    %22 = arith.addf %20, %21 : vector<8x384xf32>
    %23 = vector.extract_strided_slice %22 {offsets = [0, 0], sizes = [8, 128], strides = [1, 1]} : vector<8x384xf32> to vector<8x128xf32>
    %24 = vector.extract_strided_slice %22 {offsets = [0, 128], sizes = [8, 128], strides = [1, 1]} : vector<8x384xf32> to vector<8x128xf32>
    %25 = vector.extract_strided_slice %22 {offsets = [0, 256], sizes = [8, 128], strides = [1, 1]} : vector<8x384xf32> to vector<8x128xf32>
    %26 = vector.extract_strided_slice %17 {offsets = [0, 384], sizes = [8, 128], strides = [1, 1]} : vector<8x512xf32> to vector<8x128xf32>
    %27 = arith.mulf %24, %9 : vector<8x128xf32>
    %28 = arith.mulf %23, %26 : vector<8x128xf32>
    %29 = arith.addf %27, %28 : vector<8x128xf32>
    %30 = math.tanh %29 : vector<8x128xf32>
    %31 = arith.mulf %25, %30 : vector<8x128xf32>
    %c1_i32 = arith.constant 1 : i32
    %c8_i32_15 = arith.constant 8 : i32
    %32 = arith.muli %c1_i32, %c8_i32_15 : i32
    %33 = tpu.assume_multiple %32, 8 : i32
    %34 = arith.index_cast %33 : i32 to index
    %c0_16 = arith.constant 0 : index
    %35 = vector.load %arg9[%34, %c0_16] : memref<64x512xf32, #tpu.memory_space<vmem>>, vector<8x512xf32>
    %36 = arith.truncf %31 : vector<8x128xf32> to vector<8x128xbf16>
    %cst_17 = arith.constant dense<0.000000e+00> : vector<8x512xf32>
    %37 = tpu.matmul %36, %7, %cst_17 {dimension_numbers = #tpu.dot_dimension_numbers<[1], [0], [0], [1], [0, 0, 1, 1], [], []>} : vector<8x128xbf16>, vector<128x512xbf16>, vector<8x512xf32> -> vector<8x512xf32>
    %38 = arith.addf %35, %37 : vector<8x512xf32>
    %39 = math.tanh %38 : vector<8x512xf32>
    %40 = vector.extract_strided_slice %39 {offsets = [0, 0], sizes = [8, 384], strides = [1, 1]} : vector<8x512xf32> to vector<8x384xf32>
    %cst_18 = arith.constant 5.000000e-01 : f32
    %41 = vector.broadcast %cst_18 : f32 to vector<8x384xf32>
    %42 = arith.mulf %41, %40 : vector<8x384xf32>
    %cst_19 = arith.constant 5.000000e-01 : f32
    %43 = vector.broadcast %cst_19 : f32 to vector<8x384xf32>
    %44 = arith.addf %42, %43 : vector<8x384xf32>
    %45 = vector.extract_strided_slice %44 {offsets = [0, 0], sizes = [8, 128], strides = [1, 1]} : vector<8x384xf32> to vector<8x128xf32>
    %46 = vector.extract_strided_slice %44 {offsets = [0, 128], sizes = [8, 128], strides = [1, 1]} : vector<8x384xf32> to vector<8x128xf32>
    %47 = vector.extract_strided_slice %44 {offsets = [0, 256], sizes = [8, 128], strides = [1, 1]} : vector<8x384xf32> to vector<8x128xf32>
    %48 = vector.extract_strided_slice %39 {offsets = [0, 384], sizes = [8, 128], strides = [1, 1]} : vector<8x512xf32> to vector<8x128xf32>
    %49 = arith.mulf %46, %29 : vector<8x128xf32>
    %50 = arith.mulf %45, %48 : vector<8x128xf32>
    %51 = arith.addf %49, %50 : vector<8x128xf32>
    %52 = math.tanh %51 : vector<8x128xf32>
    %53 = arith.mulf %47, %52 : vector<8x128xf32>
    %c2_i32 = arith.constant 2 : i32
    %c8_i32_20 = arith.constant 8 : i32
    %54 = arith.muli %c2_i32, %c8_i32_20 : i32
    %55 = tpu.assume_multiple %54, 8 : i32
    %56 = arith.index_cast %55 : i32 to index
    %c0_21 = arith.constant 0 : index
    %57 = vector.load %arg9[%56, %c0_21] : memref<64x512xf32, #tpu.memory_space<vmem>>, vector<8x512xf32>
    %58 = arith.truncf %53 : vector<8x128xf32> to vector<8x128xbf16>
    %cst_22 = arith.constant dense<0.000000e+00> : vector<8x512xf32>
    %59 = tpu.matmul %58, %7, %cst_22 {dimension_numbers = #tpu.dot_dimension_numbers<[1], [0], [0], [1], [0, 0, 1, 1], [], []>} : vector<8x128xbf16>, vector<128x512xbf16>, vector<8x512xf32> -> vector<8x512xf32>
    %60 = arith.addf %57, %59 : vector<8x512xf32>
    %61 = math.tanh %60 : vector<8x512xf32>
    %62 = vector.extract_strided_slice %61 {offsets = [0, 0], sizes = [8, 384], strides = [1, 1]} : vector<8x512xf32> to vector<8x384xf32>
    %cst_23 = arith.constant 5.000000e-01 : f32
    %63 = vector.broadcast %cst_23 : f32 to vector<8x384xf32>
    %64 = arith.mulf %63, %62 : vector<8x384xf32>
    %cst_24 = arith.constant 5.000000e-01 : f32
    %65 = vector.broadcast %cst_24 : f32 to vector<8x384xf32>
    %66 = arith.addf %64, %65 : vector<8x384xf32>
    %67 = vector.extract_strided_slice %66 {offsets = [0, 0], sizes = [8, 128], strides = [1, 1]} : vector<8x384xf32> to vector<8x128xf32>
    %68 = vector.extract_strided_slice %66 {offsets = [0, 128], sizes = [8, 128], strides = [1, 1]} : vector<8x384xf32> to vector<8x128xf32>
    %69 = vector.extract_strided_slice %66 {offsets = [0, 256], sizes = [8, 128], strides = [1, 1]} : vector<8x384xf32> to vector<8x128xf32>
    %70 = vector.extract_strided_slice %61 {offsets = [0, 384], sizes = [8, 128], strides = [1, 1]} : vector<8x512xf32> to vector<8x128xf32>
    %71 = arith.mulf %68, %51 : vector<8x128xf32>
    %72 = arith.mulf %67, %70 : vector<8x128xf32>
    %73 = arith.addf %71, %72 : vector<8x128xf32>
    %74 = math.tanh %73 : vector<8x128xf32>
    %75 = arith.mulf %69, %74 : vector<8x128xf32>
    %c3_i32 = arith.constant 3 : i32
    %c8_i32_25 = arith.constant 8 : i32
    %76 = arith.muli %c3_i32, %c8_i32_25 : i32
    %77 = tpu.assume_multiple %76, 8 : i32
    %78 = arith.index_cast %77 : i32 to index
    %c0_26 = arith.constant 0 : index
    %79 = vector.load %arg9[%78, %c0_26] : memref<64x512xf32, #tpu.memory_space<vmem>>, vector<8x512xf32>
    %80 = arith.truncf %75 : vector<8x128xf32> to vector<8x128xbf16>
    %cst_27 = arith.constant dense<0.000000e+00> : vector<8x512xf32>
    %81 = tpu.matmul %80, %7, %cst_27 {dimension_numbers = #tpu.dot_dimension_numbers<[1], [0], [0], [1], [0, 0, 1, 1], [], []>} : vector<8x128xbf16>, vector<128x512xbf16>, vector<8x512xf32> -> vector<8x512xf32>
    %82 = arith.addf %79, %81 : vector<8x512xf32>
    %83 = math.tanh %82 : vector<8x512xf32>
    %84 = vector.extract_strided_slice %83 {offsets = [0, 0], sizes = [8, 384], strides = [1, 1]} : vector<8x512xf32> to vector<8x384xf32>
    %cst_28 = arith.constant 5.000000e-01 : f32
    %85 = vector.broadcast %cst_28 : f32 to vector<8x384xf32>
    %86 = arith.mulf %85, %84 : vector<8x384xf32>
    %cst_29 = arith.constant 5.000000e-01 : f32
    %87 = vector.broadcast %cst_29 : f32 to vector<8x384xf32>
    %88 = arith.addf %86, %87 : vector<8x384xf32>
    %89 = vector.extract_strided_slice %88 {offsets = [0, 0], sizes = [8, 128], strides = [1, 1]} : vector<8x384xf32> to vector<8x128xf32>
    %90 = vector.extract_strided_slice %88 {offsets = [0, 128], sizes = [8, 128], strides = [1, 1]} : vector<8x384xf32> to vector<8x128xf32>
    %91 = vector.extract_strided_slice %88 {offsets = [0, 256], sizes = [8, 128], strides = [1, 1]} : vector<8x384xf32> to vector<8x128xf32>
    %92 = vector.extract_strided_slice %83 {offsets = [0, 384], sizes = [8, 128], strides = [1, 1]} : vector<8x512xf32> to vector<8x128xf32>
    %93 = arith.mulf %90, %73 : vector<8x128xf32>
    %94 = arith.mulf %89, %92 : vector<8x128xf32>
    %95 = arith.addf %93, %94 : vector<8x128xf32>
    %96 = math.tanh %95 : vector<8x128xf32>
    %97 = arith.mulf %91, %96 : vector<8x128xf32>
    %c4_i32 = arith.constant 4 : i32
    %c8_i32_30 = arith.constant 8 : i32
    %98 = arith.muli %c4_i32, %c8_i32_30 : i32
    %99 = tpu.assume_multiple %98, 8 : i32
    %100 = arith.index_cast %99 : i32 to index
    %c0_31 = arith.constant 0 : index
    %101 = vector.load %arg9[%100, %c0_31] : memref<64x512xf32, #tpu.memory_space<vmem>>, vector<8x512xf32>
    %102 = arith.truncf %97 : vector<8x128xf32> to vector<8x128xbf16>
    %cst_32 = arith.constant dense<0.000000e+00> : vector<8x512xf32>
    %103 = tpu.matmul %102, %7, %cst_32 {dimension_numbers = #tpu.dot_dimension_numbers<[1], [0], [0], [1], [0, 0, 1, 1], [], []>} : vector<8x128xbf16>, vector<128x512xbf16>, vector<8x512xf32> -> vector<8x512xf32>
    %104 = arith.addf %101, %103 : vector<8x512xf32>
    %105 = math.tanh %104 : vector<8x512xf32>
    %106 = vector.extract_strided_slice %105 {offsets = [0, 0], sizes = [8, 384], strides = [1, 1]} : vector<8x512xf32> to vector<8x384xf32>
    %cst_33 = arith.constant 5.000000e-01 : f32
    %107 = vector.broadcast %cst_33 : f32 to vector<8x384xf32>
    %108 = arith.mulf %107, %106 : vector<8x384xf32>
    %cst_34 = arith.constant 5.000000e-01 : f32
    %109 = vector.broadcast %cst_34 : f32 to vector<8x384xf32>
    %110 = arith.addf %108, %109 : vector<8x384xf32>
    %111 = vector.extract_strided_slice %110 {offsets = [0, 0], sizes = [8, 128], strides = [1, 1]} : vector<8x384xf32> to vector<8x128xf32>
    %112 = vector.extract_strided_slice %110 {offsets = [0, 128], sizes = [8, 128], strides = [1, 1]} : vector<8x384xf32> to vector<8x128xf32>
    %113 = vector.extract_strided_slice %110 {offsets = [0, 256], sizes = [8, 128], strides = [1, 1]} : vector<8x384xf32> to vector<8x128xf32>
    %114 = vector.extract_strided_slice %105 {offsets = [0, 384], sizes = [8, 128], strides = [1, 1]} : vector<8x512xf32> to vector<8x128xf32>
    %115 = arith.mulf %112, %95 : vector<8x128xf32>
    %116 = arith.mulf %111, %114 : vector<8x128xf32>
    %117 = arith.addf %115, %116 : vector<8x128xf32>
    %118 = math.tanh %117 : vector<8x128xf32>
    %119 = arith.mulf %113, %118 : vector<8x128xf32>
    %c5_i32 = arith.constant 5 : i32
    %c8_i32_35 = arith.constant 8 : i32
    %120 = arith.muli %c5_i32, %c8_i32_35 : i32
    %121 = tpu.assume_multiple %120, 8 : i32
    %122 = arith.index_cast %121 : i32 to index
    %c0_36 = arith.constant 0 : index
    %123 = vector.load %arg9[%122, %c0_36] : memref<64x512xf32, #tpu.memory_space<vmem>>, vector<8x512xf32>
    %124 = arith.truncf %119 : vector<8x128xf32> to vector<8x128xbf16>
    %cst_37 = arith.constant dense<0.000000e+00> : vector<8x512xf32>
    %125 = tpu.matmul %124, %7, %cst_37 {dimension_numbers = #tpu.dot_dimension_numbers<[1], [0], [0], [1], [0, 0, 1, 1], [], []>} : vector<8x128xbf16>, vector<128x512xbf16>, vector<8x512xf32> -> vector<8x512xf32>
    %126 = arith.addf %123, %125 : vector<8x512xf32>
    %127 = math.tanh %126 : vector<8x512xf32>
    %128 = vector.extract_strided_slice %127 {offsets = [0, 0], sizes = [8, 384], strides = [1, 1]} : vector<8x512xf32> to vector<8x384xf32>
    %cst_38 = arith.constant 5.000000e-01 : f32
    %129 = vector.broadcast %cst_38 : f32 to vector<8x384xf32>
    %130 = arith.mulf %129, %128 : vector<8x384xf32>
    %cst_39 = arith.constant 5.000000e-01 : f32
    %131 = vector.broadcast %cst_39 : f32 to vector<8x384xf32>
    %132 = arith.addf %130, %131 : vector<8x384xf32>
    %133 = vector.extract_strided_slice %132 {offsets = [0, 0], sizes = [8, 128], strides = [1, 1]} : vector<8x384xf32> to vector<8x128xf32>
    %134 = vector.extract_strided_slice %132 {offsets = [0, 128], sizes = [8, 128], strides = [1, 1]} : vector<8x384xf32> to vector<8x128xf32>
    %135 = vector.extract_strided_slice %132 {offsets = [0, 256], sizes = [8, 128], strides = [1, 1]} : vector<8x384xf32> to vector<8x128xf32>
    %136 = vector.extract_strided_slice %127 {offsets = [0, 384], sizes = [8, 128], strides = [1, 1]} : vector<8x512xf32> to vector<8x128xf32>
    %137 = arith.mulf %134, %117 : vector<8x128xf32>
    %138 = arith.mulf %133, %136 : vector<8x128xf32>
    %139 = arith.addf %137, %138 : vector<8x128xf32>
    %140 = math.tanh %139 : vector<8x128xf32>
    %141 = arith.mulf %135, %140 : vector<8x128xf32>
    %c6_i32 = arith.constant 6 : i32
    %c8_i32_40 = arith.constant 8 : i32
    %142 = arith.muli %c6_i32, %c8_i32_40 : i32
    %143 = tpu.assume_multiple %142, 8 : i32
    %144 = arith.index_cast %143 : i32 to index
    %c0_41 = arith.constant 0 : index
    %145 = vector.load %arg9[%144, %c0_41] : memref<64x512xf32, #tpu.memory_space<vmem>>, vector<8x512xf32>
    %146 = arith.truncf %141 : vector<8x128xf32> to vector<8x128xbf16>
    %cst_42 = arith.constant dense<0.000000e+00> : vector<8x512xf32>
    %147 = tpu.matmul %146, %7, %cst_42 {dimension_numbers = #tpu.dot_dimension_numbers<[1], [0], [0], [1], [0, 0, 1, 1], [], []>} : vector<8x128xbf16>, vector<128x512xbf16>, vector<8x512xf32> -> vector<8x512xf32>
    %148 = arith.addf %145, %147 : vector<8x512xf32>
    %149 = math.tanh %148 : vector<8x512xf32>
    %150 = vector.extract_strided_slice %149 {offsets = [0, 0], sizes = [8, 384], strides = [1, 1]} : vector<8x512xf32> to vector<8x384xf32>
    %cst_43 = arith.constant 5.000000e-01 : f32
    %151 = vector.broadcast %cst_43 : f32 to vector<8x384xf32>
    %152 = arith.mulf %151, %150 : vector<8x384xf32>
    %cst_44 = arith.constant 5.000000e-01 : f32
    %153 = vector.broadcast %cst_44 : f32 to vector<8x384xf32>
    %154 = arith.addf %152, %153 : vector<8x384xf32>
    %155 = vector.extract_strided_slice %154 {offsets = [0, 0], sizes = [8, 128], strides = [1, 1]} : vector<8x384xf32> to vector<8x128xf32>
    %156 = vector.extract_strided_slice %154 {offsets = [0, 128], sizes = [8, 128], strides = [1, 1]} : vector<8x384xf32> to vector<8x128xf32>
    %157 = vector.extract_strided_slice %154 {offsets = [0, 256], sizes = [8, 128], strides = [1, 1]} : vector<8x384xf32> to vector<8x128xf32>
    %158 = vector.extract_strided_slice %149 {offsets = [0, 384], sizes = [8, 128], strides = [1, 1]} : vector<8x512xf32> to vector<8x128xf32>
    %159 = arith.mulf %156, %139 : vector<8x128xf32>
    %160 = arith.mulf %155, %158 : vector<8x128xf32>
    %161 = arith.addf %159, %160 : vector<8x128xf32>
    %162 = math.tanh %161 : vector<8x128xf32>
    %163 = arith.mulf %157, %162 : vector<8x128xf32>
    %c7_i32 = arith.constant 7 : i32
    %c8_i32_45 = arith.constant 8 : i32
    %164 = arith.muli %c7_i32, %c8_i32_45 : i32
    %165 = tpu.assume_multiple %164, 8 : i32
    %166 = arith.index_cast %165 : i32 to index
    %c0_46 = arith.constant 0 : index
    %167 = vector.load %arg9[%166, %c0_46] : memref<64x512xf32, #tpu.memory_space<vmem>>, vector<8x512xf32>
    %168 = arith.truncf %163 : vector<8x128xf32> to vector<8x128xbf16>
    %cst_47 = arith.constant dense<0.000000e+00> : vector<8x512xf32>
    %169 = tpu.matmul %168, %7, %cst_47 {dimension_numbers = #tpu.dot_dimension_numbers<[1], [0], [0], [1], [0, 0, 1, 1], [], []>} : vector<8x128xbf16>, vector<128x512xbf16>, vector<8x512xf32> -> vector<8x512xf32>
    %170 = arith.addf %167, %169 : vector<8x512xf32>
    %171 = math.tanh %170 : vector<8x512xf32>
    %172 = vector.extract_strided_slice %171 {offsets = [0, 0], sizes = [8, 384], strides = [1, 1]} : vector<8x512xf32> to vector<8x384xf32>
    %cst_48 = arith.constant 5.000000e-01 : f32
    %173 = vector.broadcast %cst_48 : f32 to vector<8x384xf32>
    %174 = arith.mulf %173, %172 : vector<8x384xf32>
    %cst_49 = arith.constant 5.000000e-01 : f32
    %175 = vector.broadcast %cst_49 : f32 to vector<8x384xf32>
    %176 = arith.addf %174, %175 : vector<8x384xf32>
    %177 = vector.extract_strided_slice %176 {offsets = [0, 0], sizes = [8, 128], strides = [1, 1]} : vector<8x384xf32> to vector<8x128xf32>
    %178 = vector.extract_strided_slice %176 {offsets = [0, 128], sizes = [8, 128], strides = [1, 1]} : vector<8x384xf32> to vector<8x128xf32>
    %179 = vector.extract_strided_slice %176 {offsets = [0, 256], sizes = [8, 128], strides = [1, 1]} : vector<8x384xf32> to vector<8x128xf32>
    %180 = vector.extract_strided_slice %171 {offsets = [0, 384], sizes = [8, 128], strides = [1, 1]} : vector<8x512xf32> to vector<8x128xf32>
    %181 = arith.mulf %178, %161 : vector<8x128xf32>
    %182 = arith.mulf %177, %180 : vector<8x128xf32>
    %183 = arith.addf %181, %182 : vector<8x128xf32>
    %184 = math.tanh %183 : vector<8x128xf32>
    %185 = arith.mulf %179, %184 : vector<8x128xf32>
    %c8_i32_50 = arith.constant 8 : i32
    %186 = arith.truncf %185 : vector<8x128xf32> to vector<8x128xbf16>
    %c0_51 = arith.constant 0 : index
    %c0_52 = arith.constant 0 : index
    %187 = vector.load %arg4[%c0_51, %c0_52] : memref<128x32xbf16, #tpu.memory_space<vmem>>, vector<128x32xbf16>
    %cst_53 = arith.constant dense<0.000000e+00> : vector<8x32xf32>
    %188 = tpu.matmul %186, %187, %cst_53 {dimension_numbers = #tpu.dot_dimension_numbers<[1], [0], [0], [1], [0, 0, 1, 1], [], []>} : vector<8x128xbf16>, vector<128x32xbf16>, vector<8x32xf32> -> vector<8x32xf32>
    %c0_54 = arith.constant 0 : index
    %c0_55 = arith.constant 0 : index
    %189 = vector.load %arg5[%c0_54, %c0_55] : memref<1x32xf32, #tpu.memory_space<vmem>>, vector<1x32xf32>
    %190 = vector.broadcast %189 : vector<1x32xf32> to vector<8x32xf32>
    %191 = arith.addf %188, %190 : vector<8x32xf32>
    %cst_56 = arith.constant 0.000000e+00 : f32
    %192 = vector.broadcast %cst_56 : f32 to vector<8x32xf32>
    %193 = arith.maximumf %191, %192 : vector<8x32xf32>
    %194 = arith.truncf %193 : vector<8x32xf32> to vector<8x32xbf16>
    %c0_57 = arith.constant 0 : index
    %c0_58 = arith.constant 0 : index
    %195 = vector.load %arg6[%c0_57, %c0_58] : memref<32x4xbf16, #tpu.memory_space<vmem>>, vector<32x4xbf16>
    %cst_59 = arith.constant dense<0.000000e+00> : vector<8x4xf32>
    %196 = tpu.matmul %194, %195, %cst_59 {dimension_numbers = #tpu.dot_dimension_numbers<[1], [0], [0], [1], [0, 0, 1, 1], [], []>} : vector<8x32xbf16>, vector<32x4xbf16>, vector<8x4xf32> -> vector<8x4xf32>
    %c0_60 = arith.constant 0 : index
    %c0_61 = arith.constant 0 : index
    %197 = vector.load %arg7[%c0_60, %c0_61] : memref<1x4xf32, #tpu.memory_space<vmem>>, vector<1x4xf32>
    %198 = vector.broadcast %197 : vector<1x4xf32> to vector<8x4xf32>
    %199 = arith.addf %196, %198 : vector<8x4xf32>
    %c0_62 = arith.constant 0 : index
    %c0_63 = arith.constant 0 : index
    %200 = vector.load %arg8[%c0_62, %c0_63] : memref<8x4xf32, #tpu.memory_space<vmem>>, vector<8x4xf32>
    tpu.vector_store %arg8[%c0_62, %c0_63], %199 {strides = array<i32>} : memref<8x4xf32, #tpu.memory_space<vmem>>, vector<8x4xf32>,
    return
  }
}

</mosaic_0001>

<llo_original>
// kernel: lstm_forward.1
$region0: #{lstm_forward.1}
  #allocation0 [shape = 'u32[]', space=smem, size = 0x4, offset = 0x4, fixed_abs, tag = 'smem constant byte address 0x4 - core index']
  #allocation1 [shape = 'u32[144,128]{1,0:T(1,128)}', space=vmem, size = 0x12000, scoped, tag = 'internal scratch']
  #allocation2 [shape = 'f32[64,512]{1,0:T(8,128)}', space=vmem, size = 0x20000, scoped, tag = 'scratch operand']
  %s0 = inlined_call_operand.vmem [shape: bf16[64,4], index: 0, kind: input, shape index: {}]
  %s1 = inlined_call_operand.vmem [shape: bf16[4,512], index: 1, kind: input, shape index: {}]
  %s2 = inlined_call_operand.hbm [shape: bf16[128,512], index: 2, kind: input, shape index: {}]
  %s3 = inlined_call_operand.vmem [shape: f32[1,512], index: 3, kind: input, shape index: {}]
  %s4 = inlined_call_operand.vmem [shape: bf16[128,32], index: 4, kind: input, shape index: {}]
  %s5 = inlined_call_operand.vmem [shape: f32[1,32], index: 5, kind: input, shape index: {}]
  %s6 = inlined_call_operand.vmem [shape: bf16[32,4], index: 6, kind: input, shape index: {}]
  %s7 = inlined_call_operand.vmem [shape: f32[1,4], index: 7, kind: input, shape index: {}]
  %s8 = inlined_call_operand.vmem [shape: f32[8,4], index: 8, kind: output, shape index: {}]
  %s9 = sld [smem:[#allocation0]]
  $region46: #{lstm_forward.1} parent=0
    _
  %s11 = ssub.s32 1, %s9
  %s12 = scalar_select 0, %s11, %s9
  $region1: #{lstm_forward.1} parent=0
    #allocation3 [shape = 'u8[131072]{0}', space=vmem, size = 0x20000, scoped, tag = 'input window, operand 2, single buffered']
    #allocation4 [shape = 's32[1]{0}', space=sflag, size = 0x4, scoped, tag = 'scoped memory for lstm_forward.1']
    %13 = vsyncpa [#allocation4], 0
    // Predicated region
    $region2: #{lstm_forward.1} parent=1 // pred_check
      _
    $region3: #{lstm_forward.1} parent=1 // pred_check_branch
      %15 = sbr.rel (0) target = $region5
    $region4: #{lstm_forward.1} parent=1 // pred_region
      _
    $region5: #{lstm_forward.1} parent=1 // pred_fallthru
      _
    // Predicated region
    $region6: #{lstm_forward.1} parent=1 // pred_check
      _
    $region7: #{lstm_forward.1} parent=1 // pred_check_branch
      %17 = sbr.rel (0) target = $region9
    $region8: #{lstm_forward.1} parent=1 // pred_region
      _
    $region9: #{lstm_forward.1} parent=1 // pred_fallthru
      _
    // Predicated region
    $region10: #{lstm_forward.1} parent=1 // pred_check
      _
    $region11: #{lstm_forward.1} parent=1 // pred_check_branch
      %19 = sbr.rel (0) target = $region13
    $region12: #{lstm_forward.1} parent=1 // pred_region
      %s21 = ssub.s32 4096, 4096
      %22 = vsyncadd [#allocation4], %s21
      %s23 = sshll.u32 [#allocation3], 4
      %s24 = int_to_ptr.vmem [resolvable:$true] %s23
      %29 = dma.hbm_to_vmem [thread:$0]  %s2, 4096, %s24, [#allocation4], 256, 256, 16
    $region13: #{lstm_forward.1} parent=1 // pred_fallthru
      _
    // Predicated region
    $region14: #{lstm_forward.1} parent=1 // pred_check
      _
    $region15: #{lstm_forward.1} parent=1 // pred_check_branch
      %31 = sbr.rel (0) target = $region17
    $region16: #{lstm_forward.1} parent=1 // pred_region
      _
    $region17: #{lstm_forward.1} parent=1 // pred_fallthru
      _
    // Predicated region
    $region18: #{lstm_forward.1} parent=1 // pred_check
      _
    $region19: #{lstm_forward.1} parent=1 // pred_check_branch
      %33 = sbr.rel (0) target = $region21
    $region20: #{lstm_forward.1} parent=1 // pred_region
      _
    $region21: #{lstm_forward.1} parent=1 // pred_fallthru
      _
    // Predicated region
    $region22: #{lstm_forward.1} parent=1 // pred_check
      _
    $region23: #{lstm_forward.1} parent=1 // pred_check_branch
      %35 = sbr.rel (0) target = $region25
    $region24: #{lstm_forward.1} parent=1 // pred_region
      _
    $region25: #{lstm_forward.1} parent=1 // pred_fallthru
      _
    // Predicated region
    $region26: #{lstm_forward.1} parent=1 // pred_check
      _
    $region27: #{lstm_forward.1} parent=1 // pred_check_branch
      %37 = sbr.rel (0) target = $region29
    $region28: #{lstm_forward.1} parent=1 // pred_region
      _
    $region29: #{lstm_forward.1} parent=1 // pred_fallthru
      _
    // Predicated region
    $region30: #{lstm_forward.1} parent=1 // pred_check
      _
    $region31: #{lstm_forward.1} parent=1 // pred_check_branch
      %39 = sbr.rel (0) target = $region33
    $region32: #{lstm_forward.1} parent=1 // pred_region
      _
    $region33: #{lstm_forward.1} parent=1 // pred_fallthru
      _
    // Predicated region
    $region34: #{lstm_forward.1} parent=1 // pred_check
      _
    $region35: #{lstm_forward.1} parent=1 // pred_check_branch
      %41 = sbr.rel (0) target = $region37
    $region36: #{lstm_forward.1} parent=1 // pred_region
      %42 = dma.done [#allocation4], 4096
    $region37: #{lstm_forward.1} parent=1 // pred_fallthru
      _
    %v44 = vld [vmem:[%s0] sm:$0xf]
    %v45 = vld [vmem:[%s0 + $0x4] sm:$0xf]
    %v46 = vld [vmem:[%s0 + $0x8] sm:$0xf]
    %v47 = vld [vmem:[%s0 + $0xc] sm:$0xf]
    %v48 = vld [vmem:[%s0 + $0x10] sm:$0xf]
    %v49 = vld [vmem:[%s0 + $0x14] sm:$0xf]
    %v50 = vld [vmem:[%s0 + $0x18] sm:$0xf]
    %v51 = vld [vmem:[%s0 + $0x1c] sm:$0xf]
    %v52 = vld [vmem:[%s1] sm:$0xff]
    %v53 = vld [vmem:[%s3] sm:$0xf]
    %v55 = vlaneseq
    %v56 = vshrl.u32 %v55, 7
    %v57 = vsub.s32 0, %v56
    %v58 = vrot.slane %v53, %v57
    %v59 = vlaneseq
    %v60 = vshrl.u32 %v59, 7
    %v61 = vsub.s32 1, %v60
    %v62 = vrot.slane %v53, %v61
    %v63 = vlaneseq
    %v64 = vshrl.u32 %v63, 7
    %v65 = vsub.s32 2, %v64
    %v66 = vrot.slane %v53, %v65
    %v67 = vlaneseq
    %v68 = vshrl.u32 %v67, 7
    %v69 = vsub.s32 3, %v68
    %v70 = vrot.slane %v53, %v69
    %v83 = vunpack.c.l.b16 %v44
    %v84 = vunpack.c.l.b16 %v45
    %v85 = vunpack.c.l.b16 %v46
    %v86 = vunpack.c.l.b16 %v47
    %v87 = vunpack.c.l.b16 %v48
    %v88 = vunpack.c.l.b16 %v49
    %v89 = vunpack.c.l.b16 %v50
    %v90 = vunpack.c.l.b16 %v51
    %v91 = vpack.c.b16 %v84, %v83
    %v92 = vpack.c.b16 %v86, %v85
    %v93 = vpack.c.b16 %v88, %v87
    %v94 = vpack.c.b16 %v90, %v89
    %v96 = vcombine.high %v52, %v52
    %v98 = vunpack.c.l.s4 1983009808
    %v99 = vunpack.c.0.s8 %v98
    %v100 = vlaneseq
    %v101 = vshrl.u32 %v100, 7
    %v102 = vsub.s32 %v99, %v101
    %v103 = vrot.slane %v52, %v102
    %v105 = vunpack.c.l.s4 1983009808
    %v106 = vunpack.c.0.s8 %v105
    %v107 = vlaneseq
    %v108 = vshrl.u32 %v107, 7
    %v109 = vsub.s32 %v106, %v108
    %v110 = vrot.slane %v96, %v109
    %v111 = vcombine.high %v103, %v103
    %v112 = vcombine.high %v110, %v110
    %vm113 = vcmask 31744
    %v115 = vsel %vm113, %v91, 0
    %v118 = vsel %vm113, %v92, 0
    %v121 = vsel %vm113, %v93, 0
    %v124 = vsel %vm113, %v94, 0
    %vm126 = vcmask 1041408
    %v128 = vsel %vm126, %v103, 0
    %v131 = vsel %vm126, %v111, 0
    %v134 = vsel %vm126, %v110, 0
    %v137 = vsel %vm126, %v112, 0
    %139 = vmatprep.subr.bf16.mxu0 0
    %140 = vmatpush1.bf16.msra.mxu0 0
    %141 = vmatprep.subr.bf16.mxu0 0
    %142 = vmatpush1.bf16.msra.mxu0 0
    %143 = vmatprep.subr.bf16.mxu0 0
    %144 = vmatpush1.bf16.msra.mxu0 0
    %145 = vmatprep.subr.bf16.mxu0 0
    %146 = vmatpush1.bf16.msra.mxu0 0
    %147 = vmatprep.subr.bf16.mxu0 0
    %148 = vmatpush1.bf16.msra.mxu0 0
    %149 = vmatprep.subr.bf16.mxu0 0
    %150 = vmatpush1.bf16.msra.mxu0 0
    %151 = vmatprep.subr.bf16.mxu0 0
    %152 = vmatpush1.bf16.msra.mxu0 0
    %153 = vmatprep.subr.bf16.mxu0 %v131
    %154 = vmatpush1.bf16.msra.mxu0 %v128
    %155 = vmatprep.subr.bf16.mxu0 0
    %156 = vmatpush2.bf16.msra.mxu0 0
    %157 = vmatprep.subr.bf16.mxu0 0
    %158 = vmatpush2.bf16.msra.mxu0 0
    %159 = vmatprep.subr.bf16.mxu0 0
    %160 = vmatpush2.bf16.msra.mxu0 0
    %161 = vmatprep.subr.bf16.mxu0 0
    %162 = vmatpush2.bf16.msra.mxu0 0
    %163 = vmatprep.subr.bf16.mxu0 0
    %164 = vmatpush2.bf16.msra.mxu0 0
    %165 = vmatprep.subr.bf16.mxu0 0
    %166 = vmatpush2.bf16.msra.mxu0 0
    %167 = vmatprep.subr.bf16.mxu0 0
    %168 = vmatpush2.bf16.msra.mxu0 0
    %169 = vmatprep.subr.bf16.mxu0 0
    %170 = vmatpush2.bf16.msra.mxu0 0
    %171 = vmatprep.mubr.bf16.mxu0 0
    %172 = vmatmul.mubr.bf16.gmra.mxu0 %v115
    %v173 = vpop.f32.mrf.mxu0
    %v174 = vadd.f32 %v58, %v173
    %v175 = vpop.f32.mrf.mxu0
    %v176 = vadd.f32 %v62, %v175
    %v177 = vpop.f32.mrf.mxu0
    %v178 = vadd.f32 %v58, %v177
    %v179 = vpop.f32.mrf.mxu0
    %v180 = vadd.f32 %v62, %v179
    %181 = vmatprep.mubr.bf16.mxu0 0
    %182 = vmatmul.mubr.bf16.gmra.mxu0 %v118
    %v183 = vpop.f32.mrf.mxu0
    %v184 = vadd.f32 %v58, %v183
    %v185 = vpop.f32.mrf.mxu0
    %v186 = vadd.f32 %v62, %v185
    %v187 = vpop.f32.mrf.mxu0
    %v188 = vadd.f32 %v58, %v187
    %v189 = vpop.f32.mrf.mxu0
    %v190 = vadd.f32 %v62, %v189
    %191 = vmatprep.mubr.bf16.mxu0 0
    %192 = vmatmul.mubr.bf16.gmra.mxu0 %v121
    %v193 = vpop.f32.mrf.mxu0
    %v194 = vadd.f32 %v58, %v193
    %v195 = vpop.f32.mrf.mxu0
    %v196 = vadd.f32 %v62, %v195
    %v197 = vpop.f32.mrf.mxu0
    %v198 = vadd.f32 %v58, %v197
    %v199 = vpop.f32.mrf.mxu0
    %v200 = vadd.f32 %v62, %v199
    %201 = vmatprep.mubr.bf16.mxu0 0
    %202 = vmatmul.mubr.bf16.gmra.mxu0 %v124
    %v203 = vpop.f32.mrf.mxu0
    %v204 = vadd.f32 %v58, %v203
    %v205 = vpop.f32.mrf.mxu0
    %v206 = vadd.f32 %v62, %v205
    %v207 = vpop.f32.mrf.mxu0
    %v208 = vadd.f32 %v58, %v207
    %v209 = vpop.f32.mrf.mxu0
    %v210 = vadd.f32 %v62, %v209
    %211 = vdwg.mxu0
    %212 = vmatprep.subr.bf16.mxu0 0
    %213 = vmatpush1.bf16.msra.mxu0 0
    %214 = vmatprep.subr.bf16.mxu0 0
    %215 = vmatpush1.bf16.msra.mxu0 0
    %216 = vmatprep.subr.bf16.mxu0 0
    %217 = vmatpush1.bf16.msra.mxu0 0
    %218 = vmatprep.subr.bf16.mxu0 0
    %219 = vmatpush1.bf16.msra.mxu0 0
    %220 = vmatprep.subr.bf16.mxu0 0
    %221 = vmatpush1.bf16.msra.mxu0 0
    %222 = vmatprep.subr.bf16.mxu0 0
    %223 = vmatpush1.bf16.msra.mxu0 0
    %224 = vmatprep.subr.bf16.mxu0 0
    %225 = vmatpush1.bf16.msra.mxu0 0
    %226 = vmatprep.subr.bf16.mxu0 %v137
    %227 = vmatpush1.bf16.msra.mxu0 %v134
    %228 = vmatprep.subr.bf16.mxu0 0
    %229 = vmatpush2.bf16.msra.mxu0 0
    %230 = vmatprep.subr.bf16.mxu0 0
    %231 = vmatpush2.bf16.msra.mxu0 0
    %232 = vmatprep.subr.bf16.mxu0 0
    %233 = vmatpush2.bf16.msra.mxu0 0
    %234 = vmatprep.subr.bf16.mxu0 0
    %235 = vmatpush2.bf16.msra.mxu0 0
    %236 = vmatprep.subr.bf16.mxu0 0
    %237 = vmatpush2.bf16.msra.mxu0 0
    %238 = vmatprep.subr.bf16.mxu0 0
    %239 = vmatpush2.bf16.msra.mxu0 0
    %240 = vmatprep.subr.bf16.mxu0 0
    %241 = vmatpush2.bf16.msra.mxu0 0
    %242 = vmatprep.subr.bf16.mxu0 0
    %243 = vmatpush2.bf16.msra.mxu0 0
    %244 = vmatprep.mubr.bf16.mxu0 0
    %245 = vmatmul.mubr.bf16.gmra.mxu0 %v115
    %v246 = vpop.f32.mrf.mxu0
    %v247 = vadd.f32 %v66, %v246
    %v248 = vpop.f32.mrf.mxu0
    %v249 = vadd.f32 %v70, %v248
    %v250 = vpop.f32.mrf.mxu0
    %v251 = vadd.f32 %v66, %v250
    %v252 = vpop.f32.mrf.mxu0
    %v253 = vadd.f32 %v70, %v252
    %254 = vmatprep.mubr.bf16.mxu0 0
    %255 = vmatmul.mubr.bf16.gmra.mxu0 %v118
    %v256 = vpop.f32.mrf.mxu0
    %v257 = vadd.f32 %v66, %v256
    %v258 = vpop.f32.mrf.mxu0
    %v259 = vadd.f32 %v70, %v258
    %v260 = vpop.f32.mrf.mxu0
    %v261 = vadd.f32 %v66, %v260
    %v262 = vpop.f32.mrf.mxu0
    %v263 = vadd.f32 %v70, %v262
    %264 = vmatprep.mubr.bf16.mxu0 0
    %265 = vmatmul.mubr.bf16.gmra.mxu0 %v121
    %v266 = vpop.f32.mrf.mxu0
    %v267 = vadd.f32 %v66, %v266
    %v268 = vpop.f32.mrf.mxu0
    %v269 = vadd.f32 %v70, %v268
    %v270 = vpop.f32.mrf.mxu0
    %v271 = vadd.f32 %v66, %v270
    %v272 = vpop.f32.mrf.mxu0
    %v273 = vadd.f32 %v70, %v272
    %274 = vmatprep.mubr.bf16.mxu0 0
    %275 = vmatmul.mubr.bf16.gmra.mxu0 %v124
    %v276 = vpop.f32.mrf.mxu0
    %v277 = vadd.f32 %v66, %v276
    %v278 = vpop.f32.mrf.mxu0
    %v279 = vadd.f32 %v70, %v278
    %v280 = vpop.f32.mrf.mxu0
    %v281 = vadd.f32 %v66, %v280
    %v282 = vpop.f32.mrf.mxu0
    %v283 = vadd.f32 %v70, %v282
    %284 = vdwg.mxu0
    %285 = vst [vmem:[#allocation2] sm:$0xff] %v174
    %286 = vst [vmem:[#allocation2 + $0x8] sm:$0xff] %v176
    %287 = vst [vmem:[#allocation2 + $0x10] sm:$0xff] %v247
    %288 = vst [vmem:[#allocation2 + $0x18] sm:$0xff] %v249
    %289 = vst [vmem:[#allocation2 + $0x20] sm:$0xff] %v178
    %290 = vst [vmem:[#allocation2 + $0x28] sm:$0xff] %v180
    %291 = vst [vmem:[#allocation2 + $0x30] sm:$0xff] %v251
    %292 = vst [vmem:[#allocation2 + $0x38] sm:$0xff] %v253
    %293 = vst [vmem:[#allocation2 + $0x40] sm:$0xff] %v184
    %294 = vst [vmem:[#allocation2 + $0x48] sm:$0xff] %v186
    %295 = vst [vmem:[#allocation2 + $0x50] sm:$0xff] %v257
    %296 = vst [vmem:[#allocation2 + $0x58] sm:$0xff] %v259
    %297 = vst [vmem:[#allocation2 + $0x60] sm:$0xff] %v188
    %298 = vst [vmem:[#allocation2 + $0x68] sm:$0xff] %v190
    %299 = vst [vmem:[#allocation2 + $0x70] sm:$0xff] %v261
    %300 = vst [vmem:[#allocation2 + $0x78] sm:$0xff] %v263
    %301 = vst [vmem:[#allocation2 + $0x80] sm:$0xff] %v194
    %302 = vst [vmem:[#allocation2 + $0x88] sm:$0xff] %v196
    %303 = vst [vmem:[#allocation2 + $0x90] sm:$0xff] %v267
    %304 = vst [vmem:[#allocation2 + $0x98] sm:$0xff] %v269
    %305 = vst [vmem:[#allocation2 + $0xa0] sm:$0xff] %v198
    %306 = vst [vmem:[#allocation2 + $0xa8] sm:$0xff] %v200
    %307 = vst [vmem:[#allocation2 + $0xb0] sm:$0xff] %v271
    %308 = vst [vmem:[#allocation2 + $0xb8] sm:$0xff] %v273
    %309 = vst [vmem:[#allocation2 + $0xc0] sm:$0xff] %v204
    %310 = vst [vmem:[#allocation2 + $0xc8] sm:$0xff] %v206
    %311 = vst [vmem:[#allocation2 + $0xd0] sm:$0xff] %v277
    %312 = vst [vmem:[#allocation2 + $0xd8] sm:$0xff] %v279
    %313 = vst [vmem:[#allocation2 + $0xe0] sm:$0xff] %v208
    %314 = vst [vmem:[#allocation2 + $0xe8] sm:$0xff] %v210
    %315 = vst [vmem:[#allocation2 + $0xf0] sm:$0xff] %v281
    %316 = vst [vmem:[#allocation2 + $0xf8] sm:$0xff] %v283
    %v317 = vld [vmem:[#allocation3] sm:$0xff]
    %v318 = vld [vmem:[#allocation3 + $0x8] sm:$0xff]
    %v319 = vld [vmem:[#allocation3 + $0x10] sm:$0xff]
    %v320 = vld [vmem:[#allocation3 + $0x18] sm:$0xff]
    %v321 = vld [vmem:[#allocation3 + $0x20] sm:$0xff]
    %v322 = vld [vmem:[#allocation3 + $0x28] sm:$0xff]
    %v323 = vld [vmem:[#allocation3 + $0x30] sm:$0xff]
    %v324 = vld [vmem:[#allocation3 + $0x38] sm:$0xff]
    %v325 = vld [vmem:[#allocation3 + $0x40] sm:$0xff]
    %v326 = vld [vmem:[#allocation3 + $0x48] sm:$0xff]
    %v327 = vld [vmem:[#allocation3 + $0x50] sm:$0xff]
    %v328 = vld [vmem:[#allocation3 + $0x58] sm:$0xff]
    %v329 = vld [vmem:[#allocation3 + $0x60] sm:$0xff]
    %v330 = vld [vmem:[#allocation3 + $0x68] sm:$0xff]
    %v331 = vld [vmem:[#allocation3 + $0x70] sm:$0xff]
    %v332 = vld [vmem:[#allocation3 + $0x78] sm:$0xff]
    %v333 = vld [vmem:[#allocation3 + $0x80] sm:$0xff]
    %v334 = vld [vmem:[#allocation3 + $0x88] sm:$0xff]
    %v335 = vld [vmem:[#allocation3 + $0x90] sm:$0xff]
    %v336 = vld [vmem:[#allocation3 + $0x98] sm:$0xff]
    %v337 = vld [vmem:[#allocation3 + $0xa0] sm:$0xff]
    %v338 = vld [vmem:[#allocation3 + $0xa8] sm:$0xff]
    %v339 = vld [vmem:[#allocation3 + $0xb0] sm:$0xff]
    %v340 = vld [vmem:[#allocation3 + $0xb8] sm:$0xff]
    %v341 = vld [vmem:[#allocation3 + $0xc0] sm:$0xff]
    %v342 = vld [vmem:[#allocation3 + $0xc8] sm:$0xff]
    %v343 = vld [vmem:[#allocation3 + $0xd0] sm:$0xff]
    %v344 = vld [vmem:[#allocation3 + $0xd8] sm:$0xff]
    %v345 = vld [vmem:[#allocation3 + $0xe0] sm:$0xff]
    %v346 = vld [vmem:[#allocation3 + $0xe8] sm:$0xff]
    %v347 = vld [vmem:[#allocation3 + $0xf0] sm:$0xff]
    %v348 = vld [vmem:[#allocation3 + $0xf8] sm:$0xff]
    %s349 = smul.u32 0, 4
    %s350 = smul.addr %s349, 8
    %s351 = scalar_lea.vmem [#allocation2], %s350
    %v352 = vld [vmem:[%s351] sm:$0xff]
    %v353 = vld [vmem:[%s351 + $0x8] sm:$0xff]
    %v354 = vld [vmem:[%s351 + $0x10] sm:$0xff]
    %v355 = vld [vmem:[%s351 + $0x18] sm:$0xff]
    %v388 = vunpack.c.l.b16 %v317
    %v389 = vunpack.c.h.b16 %v317
    %v390 = vunpack.c.l.b16 %v318
    %v391 = vunpack.c.h.b16 %v318
    %v392 = vunpack.c.l.b16 %v319
    %v393 = vunpack.c.h.b16 %v319
    %v394 = vunpack.c.l.b16 %v320
    %v395 = vunpack.c.h.b16 %v320
    %v396 = vunpack.c.l.b16 %v321
    %v397 = vunpack.c.h.b16 %v321
    %v398 = vunpack.c.l.b16 %v322
    %v399 = vunpack.c.h.b16 %v322
    %v400 = vunpack.c.l.b16 %v323
    %v401 = vunpack.c.h.b16 %v323
    %v402 = vunpack.c.l.b16 %v324
    %v403 = vunpack.c.h.b16 %v324
    %v404 = vunpack.c.l.b16 %v325
    %v405 = vunpack.c.h.b16 %v325
    %v406 = vunpack.c.l.b16 %v326
    %v407 = vunpack.c.h.b16 %v326
    %v408 = vunpack.c.l.b16 %v327
    %v409 = vunpack.c.h.b16 %v327
    %v410 = vunpack.c.l.b16 %v328
    %v411 = vunpack.c.h.b16 %v328
    %v412 = vunpack.c.l.b16 %v329
    %v413 = vunpack.c.h.b16 %v329
    %v414 = vunpack.c.l.b16 %v330
    %v415 = vunpack.c.h.b16 %v330
    %v416 = vunpack.c.l.b16 %v331
    %v417 = vunpack.c.h.b16 %v331
    %v418 = vunpack.c.l.b16 %v332
    %v419 = vunpack.c.h.b16 %v332
    %v420 = vunpack.c.l.b16 %v333
    %v421 = vunpack.c.h.b16 %v333
    %v422 = vunpack.c.l.b16 %v334
    %v423 = vunpack.c.h.b16 %v334
    %v424 = vunpack.c.l.b16 %v335
    %v425 = vunpack.c.h.b16 %v335
    %v426 = vunpack.c.l.b16 %v336
    %v427 = vunpack.c.h.b16 %v336
    %v428 = vunpack.c.l.b16 %v337
    %v429 = vunpack.c.h.b16 %v337
    %v430 = vunpack.c.l.b16 %v338
    %v431 = vunpack.c.h.b16 %v338
    %v432 = vunpack.c.l.b16 %v339
    %v433 = vunpack.c.h.b16 %v339
    %v434 = vunpack.c.l.b16 %v340
    %v435 = vunpack.c.h.b16 %v340
    %v436 = vunpack.c.l.b16 %v341
    %v437 = vunpack.c.h.b16 %v341
    %v438 = vunpack.c.l.b16 %v342
    %v439 = vunpack.c.h.b16 %v342
    %v440 = vunpack.c.l.b16 %v343
    %v441 = vunpack.c.h.b16 %v343
    %v442 = vunpack.c.l.b16 %v344
    %v443 = vunpack.c.h.b16 %v344
    %v444 = vunpack.c.l.b16 %v345
    %v445 = vunpack.c.h.b16 %v345
    %v446 = vunpack.c.l.b16 %v346
    %v447 = vunpack.c.h.b16 %v346
    %v448 = vunpack.c.l.b16 %v347
    %v449 = vunpack.c.h.b16 %v347
    %v450 = vunpack.c.l.b16 %v348
    %v451 = vunpack.c.h.b16 %v348
    %v452 = vpack.c.b16 %v392, %v388
    %v453 = vpack.c.b16 %v393, %v389
    %v454 = vpack.c.b16 %v394, %v390
    %v455 = vpack.c.b16 %v395, %v391
    %v456 = vpack.c.b16 %v400, %v396
    %v457 = vpack.c.b16 %v401, %v397
    %v458 = vpack.c.b16 %v402, %v398
    %v459 = vpack.c.b16 %v403, %v399
    %v460 = vpack.c.b16 %v408, %v404
    %v461 = vpack.c.b16 %v409, %v405
    %v462 = vpack.c.b16 %v410, %v406
    %v463 = vpack.c.b16 %v411, %v407
    %v464 = vpack.c.b16 %v416, %v412
    %v465 = vpack.c.b16 %v417, %v413
    %v466 = vpack.c.b16 %v418, %v414
    %v467 = vpack.c.b16 %v419, %v415
    %v468 = vpack.c.b16 %v424, %v420
    %v469 = vpack.c.b16 %v425, %v421
    %v470 = vpack.c.b16 %v426, %v422
    %v471 = vpack.c.b16 %v427, %v423
    %v472 = vpack.c.b16 %v432, %v428
    %v473 = vpack.c.b16 %v433, %v429
    %v474 = vpack.c.b16 %v434, %v430
    %v475 = vpack.c.b16 %v435, %v431
    %v476 = vpack.c.b16 %v440, %v436
    %v477 = vpack.c.b16 %v441, %v437
    %v478 = vpack.c.b16 %v442, %v438
    %v479 = vpack.c.b16 %v443, %v439
    %v480 = vpack.c.b16 %v448, %v444
    %v481 = vpack.c.b16 %v449, %v445
    %v482 = vpack.c.b16 %v450, %v446
    %v483 = vpack.c.b16 %v451, %v447
    %516 = vmatprep.subr.bf16.mxu0 %v481
    %517 = vmatpush1.bf16.msra.mxu0 %v480
    %518 = vmatprep.subr.bf16.mxu0 %v477
    %519 = vmatpush1.bf16.msra.mxu0 %v476
    %520 = vmatprep.subr.bf16.mxu0 %v473
    %521 = vmatpush1.bf16.msra.mxu0 %v472
    %522 = vmatprep.subr.bf16.mxu0 %v469
    %523 = vmatpush1.bf16.msra.mxu0 %v468
    %524 = vmatprep.subr.bf16.mxu0 %v465
    %525 = vmatpush1.bf16.msra.mxu0 %v464
    %526 = vmatprep.subr.bf16.mxu0 %v461
    %527 = vmatpush1.bf16.msra.mxu0 %v460
    %528 = vmatprep.subr.bf16.mxu0 %v457
    %529 = vmatpush1.bf16.msra.mxu0 %v456
    %530 = vmatprep.subr.bf16.mxu0 %v453
    %531 = vmatpush1.bf16.msra.mxu0 %v452
    %532 = vmatprep.subr.bf16.mxu0 0
    %533 = vmatpush2.bf16.msra.mxu0 0
    %534 = vmatprep.subr.bf16.mxu0 0
    %535 = vmatpush2.bf16.msra.mxu0 0
    %536 = vmatprep.subr.bf16.mxu0 0
    %537 = vmatpush2.bf16.msra.mxu0 0
    %538 = vmatprep.subr.bf16.mxu0 0
    %539 = vmatpush2.bf16.msra.mxu0 0
    %540 = vmatprep.subr.bf16.mxu0 0
    %541 = vmatpush2.bf16.msra.mxu0 0
    %542 = vmatprep.subr.bf16.mxu0 0
    %543 = vmatpush2.bf16.msra.mxu0 0
    %544 = vmatprep.subr.bf16.mxu0 0
    %545 = vmatpush2.bf16.msra.mxu0 0
    %546 = vmatprep.subr.bf16.mxu0 0
    %547 = vmatpush2.bf16.msra.mxu0 0
    %548 = vmatprep.mubr.bf16.mxu0 0
    %549 = vmatmul.mubr.bf16.gmra.mxu0 0
    %v550 = vpop.f32.mrf.mxu0
    %v551 = vadd.f32 0.0, %v550
    %v552 = vpop.f32.mrf.mxu0
    %v553 = vadd.f32 0.0, %v552
    %v554 = vpop.f32.mrf.mxu0
    %v555 = vpop.f32.mrf.mxu0
    %556 = vdwg.mxu0
    %557 = vmatprep.subr.bf16.mxu0 %v483
    %558 = vmatpush1.bf16.msra.mxu0 %v482
    %559 = vmatprep.subr.bf16.mxu0 %v479
    %560 = vmatpush1.bf16.msra.mxu0 %v478
    %561 = vmatprep.subr.bf16.mxu0 %v475
    %562 = vmatpush1.bf16.msra.mxu0 %v474
    %563 = vmatprep.subr.bf16.mxu0 %v471
    %564 = vmatpush1.bf16.msra.mxu0 %v470
    %565 = vmatprep.subr.bf16.mxu0 %v467
    %566 = vmatpush1.bf16.msra.mxu0 %v466
    %567 = vmatprep.subr.bf16.mxu0 %v463
    %568 = vmatpush1.bf16.msra.mxu0 %v462
    %569 = vmatprep.subr.bf16.mxu0 %v459
    %570 = vmatpush1.bf16.msra.mxu0 %v458
    %571 = vmatprep.subr.bf16.mxu0 %v455
    %572 = vmatpush1.bf16.msra.mxu0 %v454
    %573 = vmatprep.subr.bf16.mxu0 0
    %574 = vmatpush2.bf16.msra.mxu0 0
    %575 = vmatprep.subr.bf16.mxu0 0
    %576 = vmatpush2.bf16.msra.mxu0 0
    %577 = vmatprep.subr.bf16.mxu0 0
    %578 = vmatpush2.bf16.msra.mxu0 0
    %579 = vmatprep.subr.bf16.mxu0 0
    %580 = vmatpush2.bf16.msra.mxu0 0
    %581 = vmatprep.subr.bf16.mxu0 0
    %582 = vmatpush2.bf16.msra.mxu0 0
    %583 = vmatprep.subr.bf16.mxu0 0
    %584 = vmatpush2.bf16.msra.mxu0 0
    %585 = vmatprep.subr.bf16.mxu0 0
    %586 = vmatpush2.bf16.msra.mxu0 0
    %587 = vmatprep.subr.bf16.mxu0 0
    %588 = vmatpush2.bf16.msra.mxu0 0
    %589 = vmatprep.mubr.bf16.mxu0 0
    %590 = vmatmul.mubr.bf16.gmra.mxu0 0
    %v591 = vpop.f32.mrf.mxu0
    %v592 = vadd.f32 0.0, %v591
    %v593 = vpop.f32.mrf.mxu0
    %v594 = vadd.f32 0.0, %v593
    %v595 = vpop.f32.mrf.mxu0
    %v596 = vpop.f32.mrf.mxu0
    %597 = vdwg.mxu0
    %v598 = vadd.f32 %v352, %v551
    %v599 = vadd.f32 %v353, %v553
    %v600 = vadd.f32 %v354, %v592
    %v601 = vadd.f32 %v355, %v594
    %v602 = vtanh.pop %v598
    %v603 = vtanh.pop %v599
    %v604 = vtanh.pop %v600
    %v605 = vtanh.pop %v601
    %v606 = vmul.f32 %v602, 0.5
    %v607 = vmul.f32 %v603, 0.5
    %v608 = vmul.f32 %v604, 0.5
    %v609 = vadd.f32 %v606, 0.5
    %v610 = vadd.f32 %v607, 0.5
    %v611 = vadd.f32 %v608, 0.5
    %v612 = vmul.f32 %v610, 0.0
    %v613 = vmul.f32 %v609, %v605
    %v614 = vadd.f32 %v612, %v613
    %v615 = vtanh.pop %v614
    %v616 = vmul.f32 %v611, %v615
    %s617 = smul.u32 1, 4
    %s618 = smul.addr %s617, 8
    %s619 = scalar_lea.vmem [#allocation2], %s618
    %v620 = vld [vmem:[%s619] sm:$0xff]
    %v621 = vld [vmem:[%s619 + $0x8] sm:$0xff]
    %v622 = vld [vmem:[%s619 + $0x10] sm:$0xff]
    %v623 = vld [vmem:[%s619 + $0x18] sm:$0xff]
    %v624 = vpack.c.bf16 %v616, %v616
    %625 = vmatprep.subr.bf16.mxu0 %v481
    %626 = vmatpush1.bf16.msra.mxu0 %v480
    %627 = vmatprep.subr.bf16.mxu0 %v477
    %628 = vmatpush1.bf16.msra.mxu0 %v476
    %629 = vmatprep.subr.bf16.mxu0 %v473
    %630 = vmatpush1.bf16.msra.mxu0 %v472
    %631 = vmatprep.subr.bf16.mxu0 %v469
    %632 = vmatpush1.bf16.msra.mxu0 %v468
    %633 = vmatprep.subr.bf16.mxu0 %v465
    %634 = vmatpush1.bf16.msra.mxu0 %v464
    %635 = vmatprep.subr.bf16.mxu0 %v461
    %636 = vmatpush1.bf16.msra.mxu0 %v460
    %637 = vmatprep.subr.bf16.mxu0 %v457
    %638 = vmatpush1.bf16.msra.mxu0 %v456
    %639 = vmatprep.subr.bf16.mxu0 %v453
    %640 = vmatpush1.bf16.msra.mxu0 %v452
    %641 = vmatprep.subr.bf16.mxu0 0
    %642 = vmatpush2.bf16.msra.mxu0 0
    %643 = vmatprep.subr.bf16.mxu0 0
    %644 = vmatpush2.bf16.msra.mxu0 0
    %645 = vmatprep.subr.bf16.mxu0 0
    %646 = vmatpush2.bf16.msra.mxu0 0
    %647 = vmatprep.subr.bf16.mxu0 0
    %648 = vmatpush2.bf16.msra.mxu0 0
    %649 = vmatprep.subr.bf16.mxu0 0
    %650 = vmatpush2.bf16.msra.mxu0 0
    %651 = vmatprep.subr.bf16.mxu0 0
    %652 = vmatpush2.bf16.msra.mxu0 0
    %653 = vmatprep.subr.bf16.mxu0 0
    %654 = vmatpush2.bf16.msra.mxu0 0
    %655 = vmatprep.subr.bf16.mxu0 0
    %656 = vmatpush2.bf16.msra.mxu0 0
    %657 = vmatprep.mubr.bf16.mxu0 0
    %658 = vmatmul.mubr.bf16.gmra.mxu0 %v624
    %v659 = vpop.f32.mrf.mxu0
    %v660 = vadd.f32 0.0, %v659
    %v661 = vpop.f32.mrf.mxu0
    %v662 = vadd.f32 0.0, %v661
    %v663 = vpop.f32.mrf.mxu0
    %v664 = vpop.f32.mrf.mxu0
    %665 = vdwg.mxu0
    %666 = vmatprep.subr.bf16.mxu0 %v483
    %667 = vmatpush1.bf16.msra.mxu0 %v482
    %668 = vmatprep.subr.bf16.mxu0 %v479
    %669 = vmatpush1.bf16.msra.mxu0 %v478
    %670 = vmatprep.subr.bf16.mxu0 %v475
    %671 = vmatpush1.bf16.msra.mxu0 %v474
    %672 = vmatprep.subr.bf16.mxu0 %v471
    %673 = vmatpush1.bf16.msra.mxu0 %v470
    %674 = vmatprep.subr.bf16.mxu0 %v467
    %675 = vmatpush1.bf16.msra.mxu0 %v466
    %676 = vmatprep.subr.bf16.mxu0 %v463
    %677 = vmatpush1.bf16.msra.mxu0 %v462
    %678 = vmatprep.subr.bf16.mxu0 %v459
    %679 = vmatpush1.bf16.msra.mxu0 %v458
    %680 = vmatprep.subr.bf16.mxu0 %v455
    %681 = vmatpush1.bf16.msra.mxu0 %v454
    %682 = vmatprep.subr.bf16.mxu0 0
    %683 = vmatpush2.bf16.msra.mxu0 0
    %684 = vmatprep.subr.bf16.mxu0 0
    %685 = vmatpush2.bf16.msra.mxu0 0
    %686 = vmatprep.subr.bf16.mxu0 0
    %687 = vmatpush2.bf16.msra.mxu0 0
    %688 = vmatprep.subr.bf16.mxu0 0
    %689 = vmatpush2.bf16.msra.mxu0 0
    %690 = vmatprep.subr.bf16.mxu0 0
    %691 = vmatpush2.bf16.msra.mxu0 0
    %692 = vmatprep.subr.bf16.mxu0 0
    %693 = vmatpush2.bf16.msra.mxu0 0
    %694 = vmatprep.subr.bf16.mxu0 0
    %695 = vmatpush2.bf16.msra.mxu0 0
    %696 = vmatprep.subr.bf16.mxu0 0
    %697 = vmatpush2.bf16.msra.mxu0 0
    %698 = vmatprep.mubr.bf16.mxu0 0
    %699 = vmatmul.mubr.bf16.gmra.mxu0 %v624
    %v700 = vpop.f32.mrf.mxu0
    %v701 = vadd.f32 0.0, %v700
    %v702 = vpop.f32.mrf.mxu0
    %v703 = vadd.f32 0.0, %v702
    %v704 = vpop.f32.mrf.mxu0
    %v705 = vpop.f32.mrf.mxu0
    %706 = vdwg.mxu0
    %v707 = vadd.f32 %v620, %v660
    %v708 = vadd.f32 %v621, %v662
    %v709 = vadd.f32 %v622, %v701
    %v710 = vadd.f32 %v623, %v703
    %v711 = vtanh.pop %v707
    %v712 = vtanh.pop %v708
    %v713 = vtanh.pop %v709
    %v714 = vtanh.pop %v710
    %v715 = vmul.f32 %v711, 0.5
    %v716 = vmul.f32 %v712, 0.5
    %v717 = vmul.f32 %v713, 0.5
    %v718 = vadd.f32 %v715, 0.5
    %v719 = vadd.f32 %v716, 0.5
    %v720 = vadd.f32 %v717, 0.5
    %v721 = vmul.f32 %v719, %v614
    %v722 = vmul.f32 %v718, %v714
    %v723 = vadd.f32 %v721, %v722
    %v724 = vtanh.pop %v723
    %v725 = vmul.f32 %v720, %v724
    %s726 = smul.u32 2, 4
    %s727 = smul.addr %s726, 8
    %s728 = scalar_lea.vmem [#allocation2], %s727
    %v729 = vld [vmem:[%s728] sm:$0xff]
    %v730 = vld [vmem:[%s728 + $0x8] sm:$0xff]
    %v731 = vld [vmem:[%s728 + $0x10] sm:$0xff]
    %v732 = vld [vmem:[%s728 + $0x18] sm:$0xff]
    %v733 = vpack.c.bf16 %v725, %v725
    %734 = vmatprep.subr.bf16.mxu0 %v481
    %735 = vmatpush1.bf16.msra.mxu0 %v480
    %736 = vmatprep.subr.bf16.mxu0 %v477
    %737 = vmatpush1.bf16.msra.mxu0 %v476
    %738 = vmatprep.subr.bf16.mxu0 %v473
    %739 = vmatpush1.bf16.msra.mxu0 %v472
    %740 = vmatprep.subr.bf16.mxu0 %v469
    %741 = vmatpush1.bf16.msra.mxu0 %v468
    %742 = vmatprep.subr.bf16.mxu0 %v465
    %743 = vmatpush1.bf16.msra.mxu0 %v464
    %744 = vmatprep.subr.bf16.mxu0 %v461
    %745 = vmatpush1.bf16.msra.mxu0 %v460
    %746 = vmatprep.subr.bf16.mxu0 %v457
    %747 = vmatpush1.bf16.msra.mxu0 %v456
    %748 = vmatprep.subr.bf16.mxu0 %v453
    %749 = vmatpush1.bf16.msra.mxu0 %v452
    %750 = vmatprep.subr.bf16.mxu0 0
    %751 = vmatpush2.bf16.msra.mxu0 0
    %752 = vmatprep.subr.bf16.mxu0 0
    %753 = vmatpush2.bf16.msra.mxu0 0
    %754 = vmatprep.subr.bf16.mxu0 0
    %755 = vmatpush2.bf16.msra.mxu0 0
    %756 = vmatprep.subr.bf16.mxu0 0
    %757 = vmatpush2.bf16.msra.mxu0 0
    %758 = vmatprep.subr.bf16.mxu0 0
    %759 = vmatpush2.bf16.msra.mxu0 0
    %760 = vmatprep.subr.bf16.mxu0 0
    %761 = vmatpush2.bf16.msra.mxu0 0
    %762 = vmatprep.subr.bf16.mxu0 0
    %763 = vmatpush2.bf16.msra.mxu0 0
    %764 = vmatprep.subr.bf16.mxu0 0
    %765 = vmatpush2.bf16.msra.mxu0 0
    %766 = vmatprep.mubr.bf16.mxu0 0
    %767 = vmatmul.mubr.bf16.gmra.mxu0 %v733
    %v768 = vpop.f32.mrf.mxu0
    %v769 = vadd.f32 0.0, %v768
    %v770 = vpop.f32.mrf.mxu0
    %v771 = vadd.f32 0.0, %v770
    %v772 = vpop.f32.mrf.mxu0
    %v773 = vpop.f32.mrf.mxu0
    %774 = vdwg.mxu0
    %775 = vmatprep.subr.bf16.mxu0 %v483
    %776 = vmatpush1.bf16.msra.mxu0 %v482
    %777 = vmatprep.subr.bf16.mxu0 %v479
    %778 = vmatpush1.bf16.msra.mxu0 %v478
    %779 = vmatprep.subr.bf16.mxu0 %v475
    %780 = vmatpush1.bf16.msra.mxu0 %v474
    %781 = vmatprep.subr.bf16.mxu0 %v471
    %782 = vmatpush1.bf16.msra.mxu0 %v470
    %783 = vmatprep.subr.bf16.mxu0 %v467
    %784 = vmatpush1.bf16.msra.mxu0 %v466
    %785 = vmatprep.subr.bf16.mxu0 %v463
    %786 = vmatpush1.bf16.msra.mxu0 %v462
    %787 = vmatprep.subr.bf16.mxu0 %v459
    %788 = vmatpush1.bf16.msra.mxu0 %v458
    %789 = vmatprep.subr.bf16.mxu0 %v455
    %790 = vmatpush1.bf16.msra.mxu0 %v454
    %791 = vmatprep.subr.bf16.mxu0 0
    %792 = vmatpush2.bf16.msra.mxu0 0
    %793 = vmatprep.subr.bf16.mxu0 0
    %794 = vmatpush2.bf16.msra.mxu0 0
    %795 = vmatprep.subr.bf16.mxu0 0
    %796 = vmatpush2.bf16.msra.mxu0 0
    %797 = vmatprep.subr.bf16.mxu0 0
    %798 = vmatpush2.bf16.msra.mxu0 0
    %799 = vmatprep.subr.bf16.mxu0 0
    %800 = vmatpush2.bf16.msra.mxu0 0
    %801 = vmatprep.subr.bf16.mxu0 0
    %802 = vmatpush2.bf16.msra.mxu0 0
    %803 = vmatprep.subr.bf16.mxu0 0
    %804 = vmatpush2.bf16.msra.mxu0 0
    %805 = vmatprep.subr.bf16.mxu0 0
    %806 = vmatpush2.bf16.msra.mxu0 0
    %807 = vmatprep.mubr.bf16.mxu0 0
    %808 = vmatmul.mubr.bf16.gmra.mxu0 %v733
    %v809 = vpop.f32.mrf.mxu0
    %v810 = vadd.f32 0.0, %v809
    %v811 = vpop.f32.mrf.mxu0
    %v812 = vadd.f32 0.0, %v811
    %v813 = vpop.f32.mrf.mxu0
    %v814 = vpop.f32.mrf.mxu0
    %815 = vdwg.mxu0
    %v816 = vadd.f32 %v729, %v769
    %v817 = vadd.f32 %v730, %v771
    %v818 = vadd.f32 %v731, %v810
    %v819 = vadd.f32 %v732, %v812
    %v820 = vtanh.pop %v816
    %v821 = vtanh.pop %v817
    %v822 = vtanh.pop %v818
    %v823 = vtanh.pop %v819
    %v824 = vmul.f32 %v820, 0.5
    %v825 = vmul.f32 %v821, 0.5
    %v826 = vmul.f32 %v822, 0.5
    %v827 = vadd.f32 %v824, 0.5
    %v828 = vadd.f32 %v825, 0.5
    %v829 = vadd.f32 %v826, 0.5
    %v830 = vmul.f32 %v828, %v723
    %v831 = vmul.f32 %v827, %v823
    %v832 = vadd.f32 %v830, %v831
    %v833 = vtanh.pop %v832
    %v834 = vmul.f32 %v829, %v833
    %s835 = smul.u32 3, 4
    %s836 = smul.addr %s835, 8
    %s837 = scalar_lea.vmem [#allocation2], %s836
    %v838 = vld [vmem:[%s837] sm:$0xff]
    %v839 = vld [vmem:[%s837 + $0x8] sm:$0xff]
    %v840 = vld [vmem:[%s837 + $0x10] sm:$0xff]
    %v841 = vld [vmem:[%s837 + $0x18] sm:$0xff]
    %v842 = vpack.c.bf16 %v834, %v834
    %843 = vmatprep.subr.bf16.mxu0 %v481
    %844 = vmatpush1.bf16.msra.mxu0 %v480
    %845 = vmatprep.subr.bf16.mxu0 %v477
    %846 = vmatpush1.bf16.msra.mxu0 %v476
    %847 = vmatprep.subr.bf16.mxu0 %v473
    %848 = vmatpush1.bf16.msra.mxu0 %v472
    %849 = vmatprep.subr.bf16.mxu0 %v469
    %850 = vmatpush1.bf16.msra.mxu0 %v468
    %851 = vmatprep.subr.bf16.mxu0 %v465
    %852 = vmatpush1.bf16.msra.mxu0 %v464
    %853 = vmatprep.subr.bf16.mxu0 %v461
    %854 = vmatpush1.bf16.msra.mxu0 %v460
    %855 = vmatprep.subr.bf16.mxu0 %v457
    %856 = vmatpush1.bf16.msra.mxu0 %v456
    %857 = vmatprep.subr.bf16.mxu0 %v453
    %858 = vmatpush1.bf16.msra.mxu0 %v452
    %859 = vmatprep.subr.bf16.mxu0 0
    %860 = vmatpush2.bf16.msra.mxu0 0
    %861 = vmatprep.subr.bf16.mxu0 0
    %862 = vmatpush2.bf16.msra.mxu0 0
    %863 = vmatprep.subr.bf16.mxu0 0
    %864 = vmatpush2.bf16.msra.mxu0 0
    %865 = vmatprep.subr.bf16.mxu0 0
    %866 = vmatpush2.bf16.msra.mxu0 0
    %867 = vmatprep.subr.bf16.mxu0 0
    %868 = vmatpush2.bf16.msra.mxu0 0
    %869 = vmatprep.subr.bf16.mxu0 0
    %870 = vmatpush2.bf16.msra.mxu0 0
    %871 = vmatprep.subr.bf16.mxu0 0
    %872 = vmatpush2.bf16.msra.mxu0 0
    %873 = vmatprep.subr.bf16.mxu0 0
    %874 = vmatpush2.bf16.msra.mxu0 0
    %875 = vmatprep.mubr.bf16.mxu0 0
    %876 = vmatmul.mubr.bf16.gmra.mxu0 %v842
    %v877 = vpop.f32.mrf.mxu0
    %v878 = vadd.f32 0.0, %v877
    %v879 = vpop.f32.mrf.mxu0
    %v880 = vadd.f32 0.0, %v879
    %v881 = vpop.f32.mrf.mxu0
    %v882 = vpop.f32.mrf.mxu0
    %883 = vdwg.mxu0
    %884 = vmatprep.subr.bf16.mxu0 %v483
    %885 = vmatpush1.bf16.msra.mxu0 %v482
    %886 = vmatprep.subr.bf16.mxu0 %v479
    %887 = vmatpush1.bf16.msra.mxu0 %v478
    %888 = vmatprep.subr.bf16.mxu0 %v475
    %889 = vmatpush1.bf16.msra.mxu0 %v474
    %890 = vmatprep.subr.bf16.mxu0 %v471
    %891 = vmatpush1.bf16.msra.mxu0 %v470
    %892 = vmatprep.subr.bf16.mxu0 %v467
    %893 = vmatpush1.bf16.msra.mxu0 %v466
    %894 = vmatprep.subr.bf16.mxu0 %v463
    %895 = vmatpush1.bf16.msra.mxu0 %v462
    %896 = vmatprep.subr.bf16.mxu0 %v459
    %897 = vmatpush1.bf16.msra.mxu0 %v458
    %898 = vmatprep.subr.bf16.mxu0 %v455
    %899 = vmatpush1.bf16.msra.mxu0 %v454
    %900 = vmatprep.subr.bf16.mxu0 0
    %901 = vmatpush2.bf16.msra.mxu0 0
    %902 = vmatprep.subr.bf16.mxu0 0
    %903 = vmatpush2.bf16.msra.mxu0 0
    %904 = vmatprep.subr.bf16.mxu0 0
    %905 = vmatpush2.bf16.msra.mxu0 0
    %906 = vmatprep.subr.bf16.mxu0 0
    %907 = vmatpush2.bf16.msra.mxu0 0
    %908 = vmatprep.subr.bf16.mxu0 0
    %909 = vmatpush2.bf16.msra.mxu0 0
    %910 = vmatprep.subr.bf16.mxu0 0
    %911 = vmatpush2.bf16.msra.mxu0 0
    %912 = vmatprep.subr.bf16.mxu0 0
    %913 = vmatpush2.bf16.msra.mxu0 0
    %914 = vmatprep.subr.bf16.mxu0 0
    %915 = vmatpush2.bf16.msra.mxu0 0
    %916 = vmatprep.mubr.bf16.mxu0 0
    %917 = vmatmul.mubr.bf16.gmra.mxu0 %v842
    %v918 = vpop.f32.mrf.mxu0
    %v919 = vadd.f32 0.0, %v918
    %v920 = vpop.f32.mrf.mxu0
    %v921 = vadd.f32 0.0, %v920
    %v922 = vpop.f32.mrf.mxu0
    %v923 = vpop.f32.mrf.mxu0
    %924 = vdwg.mxu0
    %v925 = vadd.f32 %v838, %v878
    %v926 = vadd.f32 %v839, %v880
    %v927 = vadd.f32 %v840, %v919
    %v928 = vadd.f32 %v841, %v921
    %v929 = vtanh.pop %v925
    %v930 = vtanh.pop %v926
    %v931 = vtanh.pop %v927
    %v932 = vtanh.pop %v928
    %v933 = vmul.f32 %v929, 0.5
    %v934 = vmul.f32 %v930, 0.5
    %v935 = vmul.f32 %v931, 0.5
    %v936 = vadd.f32 %v933, 0.5
    %v937 = vadd.f32 %v934, 0.5
    %v938 = vadd.f32 %v935, 0.5
    %v939 = vmul.f32 %v937, %v832
    %v940 = vmul.f32 %v936, %v932
    %v941 = vadd.f32 %v939, %v940
    %v942 = vtanh.pop %v941
    %v943 = vmul.f32 %v938, %v942
    %s944 = smul.u32 4, 4
    %s945 = smul.addr %s944, 8
    %s946 = scalar_lea.vmem [#allocation2], %s945
    %v947 = vld [vmem:[%s946] sm:$0xff]
    %v948 = vld [vmem:[%s946 + $0x8] sm:$0xff]
    %v949 = vld [vmem:[%s946 + $0x10] sm:$0xff]
    %v950 = vld [vmem:[%s946 + $0x18] sm:$0xff]
    %v951 = vpack.c.bf16 %v943, %v943
    %952 = vmatprep.subr.bf16.mxu0 %v481
    %953 = vmatpush1.bf16.msra.mxu0 %v480
    %954 = vmatprep.subr.bf16.mxu0 %v477
    %955 = vmatpush1.bf16.msra.mxu0 %v476
    %956 = vmatprep.subr.bf16.mxu0 %v473
    %957 = vmatpush1.bf16.msra.mxu0 %v472
    %958 = vmatprep.subr.bf16.mxu0 %v469
    %959 = vmatpush1.bf16.msra.mxu0 %v468
    %960 = vmatprep.subr.bf16.mxu0 %v465
    %961 = vmatpush1.bf16.msra.mxu0 %v464
    %962 = vmatprep.subr.bf16.mxu0 %v461
    %963 = vmatpush1.bf16.msra.mxu0 %v460
    %964 = vmatprep.subr.bf16.mxu0 %v457
    %965 = vmatpush1.bf16.msra.mxu0 %v456
    %966 = vmatprep.subr.bf16.mxu0 %v453
    %967 = vmatpush1.bf16.msra.mxu0 %v452
    %968 = vmatprep.subr.bf16.mxu0 0
    %969 = vmatpush2.bf16.msra.mxu0 0
    %970 = vmatprep.subr.bf16.mxu0 0
    %971 = vmatpush2.bf16.msra.mxu0 0
    %972 = vmatprep.subr.bf16.mxu0 0
    %973 = vmatpush2.bf16.msra.mxu0 0
    %974 = vmatprep.subr.bf16.mxu0 0
    %975 = vmatpush2.bf16.msra.mxu0 0
    %976 = vmatprep.subr.bf16.mxu0 0
    %977 = vmatpush2.bf16.msra.mxu0 0
    %978 = vmatprep.subr.bf16.mxu0 0
    %979 = vmatpush2.bf16.msra.mxu0 0
    %980 = vmatprep.subr.bf16.mxu0 0
    %981 = vmatpush2.bf16.msra.mxu0 0
    %982 = vmatprep.subr.bf16.mxu0 0
    %983 = vmatpush2.bf16.msra.mxu0 0
    %984 = vmatprep.mubr.bf16.mxu0 0
    %985 = vmatmul.mubr.bf16.gmra.mxu0 %v951
    %v986 = vpop.f32.mrf.mxu0
    %v987 = vadd.f32 0.0, %v986
    %v988 = vpop.f32.mrf.mxu0
    %v989 = vadd.f32 0.0, %v988
    %v990 = vpop.f32.mrf.mxu0
    %v991 = vpop.f32.mrf.mxu0
    %992 = vdwg.mxu0
    %993 = vmatprep.subr.bf16.mxu0 %v483
    %994 = vmatpush1.bf16.msra.mxu0 %v482
    %995 = vmatprep.subr.bf16.mxu0 %v479
    %996 = vmatpush1.bf16.msra.mxu0 %v478
    %997 = vmatprep.subr.bf16.mxu0 %v475
    %998 = vmatpush1.bf16.msra.mxu0 %v474
    %999 = vmatprep.subr.bf16.mxu0 %v471
    %1000 = vmatpush1.bf16.msra.mxu0 %v470
    %1001 = vmatprep.subr.bf16.mxu0 %v467
    %1002 = vmatpush1.bf16.msra.mxu0 %v466
    %1003 = vmatprep.subr.bf16.mxu0 %v463
    %1004 = vmatpush1.bf16.msra.mxu0 %v462
    %1005 = vmatprep.subr.bf16.mxu0 %v459
    %1006 = vmatpush1.bf16.msra.mxu0 %v458
    %1007 = vmatprep.subr.bf16.mxu0 %v455
    %1008 = vmatpush1.bf16.msra.mxu0 %v454
    %1009 = vmatprep.subr.bf16.mxu0 0
    %1010 = vmatpush2.bf16.msra.mxu0 0
    %1011 = vmatprep.subr.bf16.mxu0 0
    %1012 = vmatpush2.bf16.msra.mxu0 0
    %1013 = vmatprep.subr.bf16.mxu0 0
    %1014 = vmatpush2.bf16.msra.mxu0 0
    %1015 = vmatprep.subr.bf16.mxu0 0
    %1016 = vmatpush2.bf16.msra.mxu0 0
    %1017 = vmatprep.subr.bf16.mxu0 0
    %1018 = vmatpush2.bf16.msra.mxu0 0
    %1019 = vmatprep.subr.bf16.mxu0 0
    %1020 = vmatpush2.bf16.msra.mxu0 0
    %1021 = vmatprep.subr.bf16.mxu0 0
    %1022 = vmatpush2.bf16.msra.mxu0 0
    %1023 = vmatprep.subr.bf16.mxu0 0
    %1024 = vmatpush2.bf16.msra.mxu0 0
    %1025 = vmatprep.mubr.bf16.mxu0 0
    %1026 = vmatmul.mubr.bf16.gmra.mxu0 %v951
    %v1027 = vpop.f32.mrf.mxu0
    %v1028 = vadd.f32 0.0, %v1027
    %v1029 = vpop.f32.mrf.mxu0
    %v1030 = vadd.f32 0.0, %v1029
    %v1031 = vpop.f32.mrf.mxu0
    %v1032 = vpop.f32.mrf.mxu0
    %1033 = vdwg.mxu0
    %v1034 = vadd.f32 %v947, %v987
    %v1035 = vadd.f32 %v948, %v989
    %v1036 = vadd.f32 %v949, %v1028
    %v1037 = vadd.f32 %v950, %v1030
    %v1038 = vtanh.pop %v1034
    %v1039 = vtanh.pop %v1035
    %v1040 = vtanh.pop %v1036
    %v1041 = vtanh.pop %v1037
    %v1042 = vmul.f32 %v1038, 0.5
    %v1043 = vmul.f32 %v1039, 0.5
    %v1044 = vmul.f32 %v1040, 0.5
    %v1045 = vadd.f32 %v1042, 0.5
    %v1046 = vadd.f32 %v1043, 0.5
    %v1047 = vadd.f32 %v1044, 0.5
    %v1048 = vmul.f32 %v1046, %v941
    %v1049 = vmul.f32 %v1045, %v1041
    %v1050 = vadd.f32 %v1048, %v1049
    %v1051 = vtanh.pop %v1050
    %v1052 = vmul.f32 %v1047, %v1051
    %s1053 = smul.u32 5, 4
    %s1054 = smul.addr %s1053, 8
    %s1055 = scalar_lea.vmem [#allocation2], %s1054
    %v1056 = vld [vmem:[%s1055] sm:$0xff]
    %v1057 = vld [vmem:[%s1055 + $0x8] sm:$0xff]
    %v1058 = vld [vmem:[%s1055 + $0x10] sm:$0xff]
    %v1059 = vld [vmem:[%s1055 + $0x18] sm:$0xff]
    %v1060 = vpack.c.bf16 %v1052, %v1052
    %1061 = vmatprep.subr.bf16.mxu0 %v481
    %1062 = vmatpush1.bf16.msra.mxu0 %v480
    %1063 = vmatprep.subr.bf16.mxu0 %v477
    %1064 = vmatpush1.bf16.msra.mxu0 %v476
    %1065 = vmatprep.subr.bf16.mxu0 %v473
    %1066 = vmatpush1.bf16.msra.mxu0 %v472
    %1067 = vmatprep.subr.bf16.mxu0 %v469
    %1068 = vmatpush1.bf16.msra.mxu0 %v468
    %1069 = vmatprep.subr.bf16.mxu0 %v465
    %1070 = vmatpush1.bf16.msra.mxu0 %v464
    %1071 = vmatprep.subr.bf16.mxu0 %v461
    %1072 = vmatpush1.bf16.msra.mxu0 %v460
    %1073 = vmatprep.subr.bf16.mxu0 %v457
    %1074 = vmatpush1.bf16.msra.mxu0 %v456
    %1075 = vmatprep.subr.bf16.mxu0 %v453
    %1076 = vmatpush1.bf16.msra.mxu0 %v452
    %1077 = vmatprep.subr.bf16.mxu0 0
    %1078 = vmatpush2.bf16.msra.mxu0 0
    %1079 = vmatprep.subr.bf16.mxu0 0
    %1080 = vmatpush2.bf16.msra.mxu0 0
    %1081 = vmatprep.subr.bf16.mxu0 0
    %1082 = vmatpush2.bf16.msra.mxu0 0
    %1083 = vmatprep.subr.bf16.mxu0 0
    %1084 = vmatpush2.bf16.msra.mxu0 0
    %1085 = vmatprep.subr.bf16.mxu0 0
    %1086 = vmatpush2.bf16.msra.mxu0 0
    %1087 = vmatprep.subr.bf16.mxu0 0
    %1088 = vmatpush2.bf16.msra.mxu0 0
    %1089 = vmatprep.subr.bf16.mxu0 0
    %1090 = vmatpush2.bf16.msra.mxu0 0
    %1091 = vmatprep.subr.bf16.mxu0 0
    %1092 = vmatpush2.bf16.msra.mxu0 0
    %1093 = vmatprep.mubr.bf16.mxu0 0
    %1094 = vmatmul.mubr.bf16.gmra.mxu0 %v1060
    %v1095 = vpop.f32.mrf.mxu0
    %v1096 = vadd.f32 0.0, %v1095
    %v1097 = vpop.f32.mrf.mxu0
    %v1098 = vadd.f32 0.0, %v1097
    %v1099 = vpop.f32.mrf.mxu0
    %v1100 = vpop.f32.mrf.mxu0
    %1101 = vdwg.mxu0
    %1102 = vmatprep.subr.bf16.mxu0 %v483
    %1103 = vmatpush1.bf16.msra.mxu0 %v482
    %1104 = vmatprep.subr.bf16.mxu0 %v479
    %1105 = vmatpush1.bf16.msra.mxu0 %v478
    %1106 = vmatprep.subr.bf16.mxu0 %v475
    %1107 = vmatpush1.bf16.msra.mxu0 %v474
    %1108 = vmatprep.subr.bf16.mxu0 %v471
    %1109 = vmatpush1.bf16.msra.mxu0 %v470
    %1110 = vmatprep.subr.bf16.mxu0 %v467
    %1111 = vmatpush1.bf16.msra.mxu0 %v466
    %1112 = vmatprep.subr.bf16.mxu0 %v463
    %1113 = vmatpush1.bf16.msra.mxu0 %v462
    %1114 = vmatprep.subr.bf16.mxu0 %v459
    %1115 = vmatpush1.bf16.msra.mxu0 %v458
    %1116 = vmatprep.subr.bf16.mxu0 %v455
    %1117 = vmatpush1.bf16.msra.mxu0 %v454
    %1118 = vmatprep.subr.bf16.mxu0 0
    %1119 = vmatpush2.bf16.msra.mxu0 0
    %1120 = vmatprep.subr.bf16.mxu0 0
    %1121 = vmatpush2.bf16.msra.mxu0 0
    %1122 = vmatprep.subr.bf16.mxu0 0
    %1123 = vmatpush2.bf16.msra.mxu0 0
    %1124 = vmatprep.subr.bf16.mxu0 0
    %1125 = vmatpush2.bf16.msra.mxu0 0
    %1126 = vmatprep.subr.bf16.mxu0 0
    %1127 = vmatpush2.bf16.msra.mxu0 0
    %1128 = vmatprep.subr.bf16.mxu0 0
    %1129 = vmatpush2.bf16.msra.mxu0 0
    %1130 = vmatprep.subr.bf16.mxu0 0
    %1131 = vmatpush2.bf16.msra.mxu0 0
    %1132 = vmatprep.subr.bf16.mxu0 0
    %1133 = vmatpush2.bf16.msra.mxu0 0
    %1134 = vmatprep.mubr.bf16.mxu0 0
    %1135 = vmatmul.mubr.bf16.gmra.mxu0 %v1060
    %v1136 = vpop.f32.mrf.mxu0
    %v1137 = vadd.f32 0.0, %v1136
    %v1138 = vpop.f32.mrf.mxu0
    %v1139 = vadd.f32 0.0, %v1138
    %v1140 = vpop.f32.mrf.mxu0
    %v1141 = vpop.f32.mrf.mxu0
    %1142 = vdwg.mxu0
    %v1143 = vadd.f32 %v1056, %v1096
    %v1144 = vadd.f32 %v1057, %v1098
    %v1145 = vadd.f32 %v1058, %v1137
    %v1146 = vadd.f32 %v1059, %v1139
    %v1147 = vtanh.pop %v1143
    %v1148 = vtanh.pop %v1144
    %v1149 = vtanh.pop %v1145
    %v1150 = vtanh.pop %v1146
    %v1151 = vmul.f32 %v1147, 0.5
    %v1152 = vmul.f32 %v1148, 0.5
    %v1153 = vmul.f32 %v1149, 0.5
    %v1154 = vadd.f32 %v1151, 0.5
    %v1155 = vadd.f32 %v1152, 0.5
    %v1156 = vadd.f32 %v1153, 0.5
    %v1157 = vmul.f32 %v1155, %v1050
    %v1158 = vmul.f32 %v1154, %v1150
    %v1159 = vadd.f32 %v1157, %v1158
    %v1160 = vtanh.pop %v1159
    %v1161 = vmul.f32 %v1156, %v1160
    %s1162 = smul.u32 6, 4
    %s1163 = smul.addr %s1162, 8
    %s1164 = scalar_lea.vmem [#allocation2], %s1163
    %v1165 = vld [vmem:[%s1164] sm:$0xff]
    %v1166 = vld [vmem:[%s1164 + $0x8] sm:$0xff]
    %v1167 = vld [vmem:[%s1164 + $0x10] sm:$0xff]
    %v1168 = vld [vmem:[%s1164 + $0x18] sm:$0xff]
    %v1169 = vpack.c.bf16 %v1161, %v1161
    %1170 = vmatprep.subr.bf16.mxu0 %v481
    %1171 = vmatpush1.bf16.msra.mxu0 %v480
    %1172 = vmatprep.subr.bf16.mxu0 %v477
    %1173 = vmatpush1.bf16.msra.mxu0 %v476
    %1174 = vmatprep.subr.bf16.mxu0 %v473
    %1175 = vmatpush1.bf16.msra.mxu0 %v472
    %1176 = vmatprep.subr.bf16.mxu0 %v469
    %1177 = vmatpush1.bf16.msra.mxu0 %v468
    %1178 = vmatprep.subr.bf16.mxu0 %v465
    %1179 = vmatpush1.bf16.msra.mxu0 %v464
    %1180 = vmatprep.subr.bf16.mxu0 %v461
    %1181 = vmatpush1.bf16.msra.mxu0 %v460
    %1182 = vmatprep.subr.bf16.mxu0 %v457
    %1183 = vmatpush1.bf16.msra.mxu0 %v456
    %1184 = vmatprep.subr.bf16.mxu0 %v453
    %1185 = vmatpush1.bf16.msra.mxu0 %v452
    %1186 = vmatprep.subr.bf16.mxu0 0
    %1187 = vmatpush2.bf16.msra.mxu0 0
    %1188 = vmatprep.subr.bf16.mxu0 0
    %1189 = vmatpush2.bf16.msra.mxu0 0
    %1190 = vmatprep.subr.bf16.mxu0 0
    %1191 = vmatpush2.bf16.msra.mxu0 0
    %1192 = vmatprep.subr.bf16.mxu0 0
    %1193 = vmatpush2.bf16.msra.mxu0 0
    %1194 = vmatprep.subr.bf16.mxu0 0
    %1195 = vmatpush2.bf16.msra.mxu0 0
    %1196 = vmatprep.subr.bf16.mxu0 0
    %1197 = vmatpush2.bf16.msra.mxu0 0
    %1198 = vmatprep.subr.bf16.mxu0 0
    %1199 = vmatpush2.bf16.msra.mxu0 0
    %1200 = vmatprep.subr.bf16.mxu0 0
    %1201 = vmatpush2.bf16.msra.mxu0 0
    %1202 = vmatprep.mubr.bf16.mxu0 0
    %1203 = vmatmul.mubr.bf16.gmra.mxu0 %v1169
    %v1204 = vpop.f32.mrf.mxu0
    %v1205 = vadd.f32 0.0, %v1204
    %v1206 = vpop.f32.mrf.mxu0
    %v1207 = vadd.f32 0.0, %v1206
    %v1208 = vpop.f32.mrf.mxu0
    %v1209 = vpop.f32.mrf.mxu0
    %1210 = vdwg.mxu0
    %1211 = vmatprep.subr.bf16.mxu0 %v483
    %1212 = vmatpush1.bf16.msra.mxu0 %v482
    %1213 = vmatprep.subr.bf16.mxu0 %v479
    %1214 = vmatpush1.bf16.msra.mxu0 %v478
    %1215 = vmatprep.subr.bf16.mxu0 %v475
    %1216 = vmatpush1.bf16.msra.mxu0 %v474
    %1217 = vmatprep.subr.bf16.mxu0 %v471
    %1218 = vmatpush1.bf16.msra.mxu0 %v470
    %1219 = vmatprep.subr.bf16.mxu0 %v467
    %1220 = vmatpush1.bf16.msra.mxu0 %v466
    %1221 = vmatprep.subr.bf16.mxu0 %v463
    %1222 = vmatpush1.bf16.msra.mxu0 %v462
    %1223 = vmatprep.subr.bf16.mxu0 %v459
    %1224 = vmatpush1.bf16.msra.mxu0 %v458
    %1225 = vmatprep.subr.bf16.mxu0 %v455
    %1226 = vmatpush1.bf16.msra.mxu0 %v454
    %1227 = vmatprep.subr.bf16.mxu0 0
    %1228 = vmatpush2.bf16.msra.mxu0 0
    %1229 = vmatprep.subr.bf16.mxu0 0
    %1230 = vmatpush2.bf16.msra.mxu0 0
    %1231 = vmatprep.subr.bf16.mxu0 0
    %1232 = vmatpush2.bf16.msra.mxu0 0
    %1233 = vmatprep.subr.bf16.mxu0 0
    %1234 = vmatpush2.bf16.msra.mxu0 0
    %1235 = vmatprep.subr.bf16.mxu0 0
    %1236 = vmatpush2.bf16.msra.mxu0 0
    %1237 = vmatprep.subr.bf16.mxu0 0
    %1238 = vmatpush2.bf16.msra.mxu0 0
    %1239 = vmatprep.subr.bf16.mxu0 0
    %1240 = vmatpush2.bf16.msra.mxu0 0
    %1241 = vmatprep.subr.bf16.mxu0 0
    %1242 = vmatpush2.bf16.msra.mxu0 0
    %1243 = vmatprep.mubr.bf16.mxu0 0
    %1244 = vmatmul.mubr.bf16.gmra.mxu0 %v1169
    %v1245 = vpop.f32.mrf.mxu0
    %v1246 = vadd.f32 0.0, %v1245
    %v1247 = vpop.f32.mrf.mxu0
    %v1248 = vadd.f32 0.0, %v1247
    %v1249 = vpop.f32.mrf.mxu0
    %v1250 = vpop.f32.mrf.mxu0
    %1251 = vdwg.mxu0
    %v1252 = vadd.f32 %v1165, %v1205
    %v1253 = vadd.f32 %v1166, %v1207
    %v1254 = vadd.f32 %v1167, %v1246
    %v1255 = vadd.f32 %v1168, %v1248
    %v1256 = vtanh.pop %v1252
    %v1257 = vtanh.pop %v1253
    %v1258 = vtanh.pop %v1254
    %v1259 = vtanh.pop %v1255
    %v1260 = vmul.f32 %v1256, 0.5
    %v1261 = vmul.f32 %v1257, 0.5
    %v1262 = vmul.f32 %v1258, 0.5
    %v1263 = vadd.f32 %v1260, 0.5
    %v1264 = vadd.f32 %v1261, 0.5
    %v1265 = vadd.f32 %v1262, 0.5
    %v1266 = vmul.f32 %v1264, %v1159
    %v1267 = vmul.f32 %v1263, %v1259
    %v1268 = vadd.f32 %v1266, %v1267
    %v1269 = vtanh.pop %v1268
    %v1270 = vmul.f32 %v1265, %v1269
    %s1271 = smul.u32 7, 4
    %s1272 = smul.addr %s1271, 8
    %s1273 = scalar_lea.vmem [#allocation2], %s1272
    %v1274 = vld [vmem:[%s1273] sm:$0xff]
    %v1275 = vld [vmem:[%s1273 + $0x8] sm:$0xff]
    %v1276 = vld [vmem:[%s1273 + $0x10] sm:$0xff]
    %v1277 = vld [vmem:[%s1273 + $0x18] sm:$0xff]
    %v1278 = vpack.c.bf16 %v1270, %v1270
    %1279 = vmatprep.subr.bf16.mxu0 %v481
    %1280 = vmatpush1.bf16.msra.mxu0 %v480
    %1281 = vmatprep.subr.bf16.mxu0 %v477
    %1282 = vmatpush1.bf16.msra.mxu0 %v476
    %1283 = vmatprep.subr.bf16.mxu0 %v473
    %1284 = vmatpush1.bf16.msra.mxu0 %v472
    %1285 = vmatprep.subr.bf16.mxu0 %v469
    %1286 = vmatpush1.bf16.msra.mxu0 %v468
    %1287 = vmatprep.subr.bf16.mxu0 %v465
    %1288 = vmatpush1.bf16.msra.mxu0 %v464
    %1289 = vmatprep.subr.bf16.mxu0 %v461
    %1290 = vmatpush1.bf16.msra.mxu0 %v460
    %1291 = vmatprep.subr.bf16.mxu0 %v457
    %1292 = vmatpush1.bf16.msra.mxu0 %v456
    %1293 = vmatprep.subr.bf16.mxu0 %v453
    %1294 = vmatpush1.bf16.msra.mxu0 %v452
    %1295 = vmatprep.subr.bf16.mxu0 0
    %1296 = vmatpush2.bf16.msra.mxu0 0
    %1297 = vmatprep.subr.bf16.mxu0 0
    %1298 = vmatpush2.bf16.msra.mxu0 0
    %1299 = vmatprep.subr.bf16.mxu0 0
    %1300 = vmatpush2.bf16.msra.mxu0 0
    %1301 = vmatprep.subr.bf16.mxu0 0
    %1302 = vmatpush2.bf16.msra.mxu0 0
    %1303 = vmatprep.subr.bf16.mxu0 0
    %1304 = vmatpush2.bf16.msra.mxu0 0
    %1305 = vmatprep.subr.bf16.mxu0 0
    %1306 = vmatpush2.bf16.msra.mxu0 0
    %1307 = vmatprep.subr.bf16.mxu0 0
    %1308 = vmatpush2.bf16.msra.mxu0 0
    %1309 = vmatprep.subr.bf16.mxu0 0
    %1310 = vmatpush2.bf16.msra.mxu0 0
    %1311 = vmatprep.mubr.bf16.mxu0 0
    %1312 = vmatmul.mubr.bf16.gmra.mxu0 %v1278
    %v1313 = vpop.f32.mrf.mxu0
    %v1314 = vadd.f32 0.0, %v1313
    %v1315 = vpop.f32.mrf.mxu0
    %v1316 = vadd.f32 0.0, %v1315
    %v1317 = vpop.f32.mrf.mxu0
    %v1318 = vpop.f32.mrf.mxu0
    %1319 = vdwg.mxu0
    %1320 = vmatprep.subr.bf16.mxu0 %v483
    %1321 = vmatpush1.bf16.msra.mxu0 %v482
    %1322 = vmatprep.subr.bf16.mxu0 %v479
    %1323 = vmatpush1.bf16.msra.mxu0 %v478
    %1324 = vmatprep.subr.bf16.mxu0 %v475
    %1325 = vmatpush1.bf16.msra.mxu0 %v474
    %1326 = vmatprep.subr.bf16.mxu0 %v471
    %1327 = vmatpush1.bf16.msra.mxu0 %v470
    %1328 = vmatprep.subr.bf16.mxu0 %v467
    %1329 = vmatpush1.bf16.msra.mxu0 %v466
    %1330 = vmatprep.subr.bf16.mxu0 %v463
    %1331 = vmatpush1.bf16.msra.mxu0 %v462
    %1332 = vmatprep.subr.bf16.mxu0 %v459
    %1333 = vmatpush1.bf16.msra.mxu0 %v458
    %1334 = vmatprep.subr.bf16.mxu0 %v455
    %1335 = vmatpush1.bf16.msra.mxu0 %v454
    %1336 = vmatprep.subr.bf16.mxu0 0
    %1337 = vmatpush2.bf16.msra.mxu0 0
    %1338 = vmatprep.subr.bf16.mxu0 0
    %1339 = vmatpush2.bf16.msra.mxu0 0
    %1340 = vmatprep.subr.bf16.mxu0 0
    %1341 = vmatpush2.bf16.msra.mxu0 0
    %1342 = vmatprep.subr.bf16.mxu0 0
    %1343 = vmatpush2.bf16.msra.mxu0 0
    %1344 = vmatprep.subr.bf16.mxu0 0
    %1345 = vmatpush2.bf16.msra.mxu0 0
    %1346 = vmatprep.subr.bf16.mxu0 0
    %1347 = vmatpush2.bf16.msra.mxu0 0
    %1348 = vmatprep.subr.bf16.mxu0 0
    %1349 = vmatpush2.bf16.msra.mxu0 0
    %1350 = vmatprep.subr.bf16.mxu0 0
    %1351 = vmatpush2.bf16.msra.mxu0 0
    %1352 = vmatprep.mubr.bf16.mxu0 0
    %1353 = vmatmul.mubr.bf16.gmra.mxu0 %v1278
    %v1354 = vpop.f32.mrf.mxu0
    %v1355 = vadd.f32 0.0, %v1354
    %v1356 = vpop.f32.mrf.mxu0
    %v1357 = vadd.f32 0.0, %v1356
    %v1358 = vpop.f32.mrf.mxu0
    %v1359 = vpop.f32.mrf.mxu0
    %1360 = vdwg.mxu0
    %v1361 = vadd.f32 %v1274, %v1314
    %v1362 = vadd.f32 %v1275, %v1316
    %v1363 = vadd.f32 %v1276, %v1355
    %v1364 = vadd.f32 %v1277, %v1357
    %v1365 = vtanh.pop %v1361
    %v1366 = vtanh.pop %v1362
    %v1367 = vtanh.pop %v1363
    %v1368 = vtanh.pop %v1364
    %v1369 = vmul.f32 %v1365, 0.5
    %v1370 = vmul.f32 %v1366, 0.5
    %v1371 = vmul.f32 %v1367, 0.5
    %v1372 = vadd.f32 %v1369, 0.5
    %v1373 = vadd.f32 %v1370, 0.5
    %v1374 = vadd.f32 %v1371, 0.5
    %v1375 = vmul.f32 %v1373, %v1268
    %v1376 = vmul.f32 %v1372, %v1368
    %v1377 = vadd.f32 %v1375, %v1376
    %v1378 = vtanh.pop %v1377
    %v1379 = vmul.f32 %v1374, %v1378
    %v1380 = vpack.c.bf16 %v1379, %v1379
    %v1381 = vld [vmem:[%s4] sm:$0xf]
    %v1382 = vld [vmem:[%s4 + $0x4] sm:$0xf]
    %v1383 = vld [vmem:[%s4 + $0x8] sm:$0xf]
    %v1384 = vld [vmem:[%s4 + $0xc] sm:$0xf]
    %v1385 = vld [vmem:[%s4 + $0x10] sm:$0xf]
    %v1386 = vld [vmem:[%s4 + $0x14] sm:$0xf]
    %v1387 = vld [vmem:[%s4 + $0x18] sm:$0xf]
    %v1388 = vld [vmem:[%s4 + $0x1c] sm:$0xf]
    %v1389 = vld [vmem:[%s4 + $0x20] sm:$0xf]
    %v1390 = vld [vmem:[%s4 + $0x24] sm:$0xf]
    %v1391 = vld [vmem:[%s4 + $0x28] sm:$0xf]
    %v1392 = vld [vmem:[%s4 + $0x2c] sm:$0xf]
    %v1393 = vld [vmem:[%s4 + $0x30] sm:$0xf]
    %v1394 = vld [vmem:[%s4 + $0x34] sm:$0xf]
    %v1395 = vld [vmem:[%s4 + $0x38] sm:$0xf]
    %v1396 = vld [vmem:[%s4 + $0x3c] sm:$0xf]
    %v1397 = vld [vmem:[%s5] sm:$0x1]
    %v1399 = vlaneseq
    %v1400 = vshrl.u32 %v1399, 7
    %v1401 = vsub.s32 0, %v1400
    %v1402 = vrot.slane %v1397, %v1401
    %v1420 = vunpack.c.l.b16 %v1381
    %v1421 = vunpack.c.l.b16 %v1382
    %v1422 = vunpack.c.l.b16 %v1383
    %v1423 = vunpack.c.l.b16 %v1384
    %v1424 = vunpack.c.l.b16 %v1385
    %v1425 = vunpack.c.l.b16 %v1386
    %v1426 = vunpack.c.l.b16 %v1387
    %v1427 = vunpack.c.l.b16 %v1388
    %v1428 = vunpack.c.l.b16 %v1389
    %v1429 = vunpack.c.l.b16 %v1390
    %v1430 = vunpack.c.l.b16 %v1391
    %v1431 = vunpack.c.l.b16 %v1392
    %v1432 = vunpack.c.l.b16 %v1393
    %v1433 = vunpack.c.l.b16 %v1394
    %v1434 = vunpack.c.l.b16 %v1395
    %v1435 = vunpack.c.l.b16 %v1396
    %v1436 = vpack.c.b16 %v1421, %v1420
    %v1437 = vpack.c.b16 %v1423, %v1422
    %v1438 = vpack.c.b16 %v1425, %v1424
    %v1439 = vpack.c.b16 %v1427, %v1426
    %v1440 = vpack.c.b16 %v1429, %v1428
    %v1441 = vpack.c.b16 %v1431, %v1430
    %v1442 = vpack.c.b16 %v1433, %v1432
    %v1443 = vpack.c.b16 %v1435, %v1434
    %1452 = vmatprep.subr.bf16.mxu0 0
    %1453 = vmatpush1.bf16.msra.mxu0 %v1443
    %1454 = vmatprep.subr.bf16.mxu0 0
    %1455 = vmatpush1.bf16.msra.mxu0 %v1442
    %1456 = vmatprep.subr.bf16.mxu0 0
    %1457 = vmatpush1.bf16.msra.mxu0 %v1441
    %1458 = vmatprep.subr.bf16.mxu0 0
    %1459 = vmatpush1.bf16.msra.mxu0 %v1440
    %1460 = vmatprep.subr.bf16.mxu0 0
    %1461 = vmatpush1.bf16.msra.mxu0 %v1439
    %1462 = vmatprep.subr.bf16.mxu0 0
    %1463 = vmatpush1.bf16.msra.mxu0 %v1438
    %1464 = vmatprep.subr.bf16.mxu0 0
    %1465 = vmatpush1.bf16.msra.mxu0 %v1437
    %1466 = vmatprep.subr.bf16.mxu0 0
    %1467 = vmatpush1.bf16.msra.mxu0 %v1436
    %1468 = vmatprep.subr.bf16.mxu0 0
    %1469 = vmatpush2.bf16.msra.mxu0 0
    %1470 = vmatprep.subr.bf16.mxu0 0
    %1471 = vmatpush2.bf16.msra.mxu0 0
    %1472 = vmatprep.subr.bf16.mxu0 0
    %1473 = vmatpush2.bf16.msra.mxu0 0
    %1474 = vmatprep.subr.bf16.mxu0 0
    %1475 = vmatpush2.bf16.msra.mxu0 0
    %1476 = vmatprep.subr.bf16.mxu0 0
    %1477 = vmatpush2.bf16.msra.mxu0 0
    %1478 = vmatprep.subr.bf16.mxu0 0
    %1479 = vmatpush2.bf16.msra.mxu0 0
    %1480 = vmatprep.subr.bf16.mxu0 0
    %1481 = vmatpush2.bf16.msra.mxu0 0
    %1482 = vmatprep.subr.bf16.mxu0 0
    %1483 = vmatpush2.bf16.msra.mxu0 0
    %1484 = vmatprep.mubr.bf16.mxu0 0
    %1485 = vmatmul.mubr.bf16.gmra.mxu0 %v1380
    %v1486 = vpop.f32.mrf.mxu0
    %v1487 = vadd.f32 %v1402, %v1486
    %v1488 = vpop.f32.mrf.mxu0
    %v1489 = vpop.f32.mrf.mxu0
    %v1490 = vpop.f32.mrf.mxu0
    %1491 = vdwg.mxu0
    %v1492 = vmax.f32 %v1487, 0.0
    %v1493 = vpack.c.bf16 %v1492, %v1492
    %v1494 = vld [vmem:[%s6] sm:$0xf]
    %v1495 = vld [vmem:[%s6 + $0x4] sm:$0xf]
    %v1496 = vld [vmem:[%s6 + $0x8] sm:$0xf]
    %v1497 = vld [vmem:[%s6 + $0xc] sm:$0xf]
    %v1498 = vld [vmem:[%s7] sm:$0x1]
    %v1500 = vlaneseq
    %v1501 = vshrl.u32 %v1500, 7
    %v1502 = vsub.s32 0, %v1501
    %v1503 = vrot.slane %v1498, %v1502
    %v1509 = vunpack.c.l.b16 %v1494
    %v1510 = vunpack.c.l.b16 %v1495
    %v1511 = vunpack.c.l.b16 %v1496
    %v1512 = vunpack.c.l.b16 %v1497
    %v1513 = vpack.c.b16 %v1510, %v1509
    %v1514 = vpack.c.b16 %v1512, %v1511
    %vm1517 = vcmask 261120
    %v1519 = vsel %vm1517, %v1493, 0
    %1521 = vmatprep.subr.bf16.mxu0 0
    %1522 = vmatpush1.bf16.msra.mxu0 0
    %1523 = vmatprep.subr.bf16.mxu0 0
    %1524 = vmatpush1.bf16.msra.mxu0 0
    %1525 = vmatprep.subr.bf16.mxu0 0
    %1526 = vmatpush1.bf16.msra.mxu0 0
    %1527 = vmatprep.subr.bf16.mxu0 0
    %1528 = vmatpush1.bf16.msra.mxu0 0
    %1529 = vmatprep.subr.bf16.mxu0 0
    %1530 = vmatpush1.bf16.msra.mxu0 0
    %1531 = vmatprep.subr.bf16.mxu0 0
    %1532 = vmatpush1.bf16.msra.mxu0 0
    %1533 = vmatprep.subr.bf16.mxu0 0
    %1534 = vmatpush1.bf16.msra.mxu0 %v1514
    %1535 = vmatprep.subr.bf16.mxu0 0
    %1536 = vmatpush1.bf16.msra.mxu0 %v1513
    %1537 = vmatprep.subr.bf16.mxu0 0
    %1538 = vmatpush2.bf16.msra.mxu0 0
    %1539 = vmatprep.subr.bf16.mxu0 0
    %1540 = vmatpush2.bf16.msra.mxu0 0
    %1541 = vmatprep.subr.bf16.mxu0 0
    %1542 = vmatpush2.bf16.msra.mxu0 0
    %1543 = vmatprep.subr.bf16.mxu0 0
    %1544 = vmatpush2.bf16.msra.mxu0 0
    %1545 = vmatprep.subr.bf16.mxu0 0
    %1546 = vmatpush2.bf16.msra.mxu0 0
    %1547 = vmatprep.subr.bf16.mxu0 0
    %1548 = vmatpush2.bf16.msra.mxu0 0
    %1549 = vmatprep.subr.bf16.mxu0 0
    %1550 = vmatpush2.bf16.msra.mxu0 0
    %1551 = vmatprep.subr.bf16.mxu0 0
    %1552 = vmatpush2.bf16.msra.mxu0 0
    %1553 = vmatprep.mubr.bf16.mxu0 0
    %1554 = vmatmul.mubr.bf16.gmra.mxu0 %v1519
    %v1555 = vpop.f32.mrf.mxu0
    %v1556 = vadd.f32 %v1503, %v1555
    %v1557 = vpop.f32.mrf.mxu0
    %v1558 = vpop.f32.mrf.mxu0
    %v1559 = vpop.f32.mrf.mxu0
    %1560 = vdwg.mxu0
    %1561 = vst.msk [vmem:[%s8] sm:$0xff] %vm113, %v1556
    // Predicated region
    $region38: #{lstm_forward.1} parent=1 // pred_check
      _
    $region39: #{lstm_forward.1} parent=1 // pred_check_branch
      %1563 = sbr.rel (0) target = $region41
    $region40: #{lstm_forward.1} parent=1 // pred_region
      _
    $region41: #{lstm_forward.1} parent=1 // pred_fallthru
      _
    // Predicated region
    $region42: #{lstm_forward.1} parent=1 // pred_check
      _
    $region43: #{lstm_forward.1} parent=1 // pred_check_branch
      %1565 = sbr.rel (0) target = $region45
    $region44: #{lstm_forward.1} parent=1 // pred_region
      _
    $region45: #{lstm_forward.1} parent=1 // pred_fallthru
      _
    %1566 = vsyncpa [#allocation4], 1

</llo_original>
